<compile_context>
chip_gen: v7x
topology: tpu7x:2x2x1
jax: 0.10.0
libtpu: 0.0.40
codegen_flags: <defaults>
</compile_context>

<pallas_src>
import math
import functools

import numpy as np
import jax
import jax.numpy as jnp
from jax.experimental import pallas as pl
from jax.experimental.pallas import tpu as pltpu


# ---------------------------------------------------------------------------
# VMEM-aware sizing helpers
# ---------------------------------------------------------------------------

@functools.lru_cache(maxsize=None)
def _vmem_capacity():
    try:
        info = pltpu.get_tpu_info()
        cap = getattr(info, "vmem_capacity_bytes", None)
        if cap:
            return int(cap)
    except Exception:
        pass
    return 64 * 1024 * 1024   # conservative fallback: v7x per-TensorCore VMEM


def _mosaic_params(dims, est_vmem_bytes):
    cap = _vmem_capacity()
    ceiling = int(0.85 * cap)                  # headroom for compiler-internal scratch
    want = int(1.25 * est_vmem_bytes) + (4 << 20)
    vmem = max(min(want, ceiling), min(32 << 20, ceiling))
    return pltpu.CompilerParams(dimension_semantics=dims, vmem_limit_bytes=vmem)


def _choose_tm(M, per_row_bytes, resident_bytes, cap):
    # Row-tile size: biggest tile that (double-buffered) fits next to the resident weights.
    tm_cap = 1024 if cap >= (96 << 20) else (512 if cap >= (48 << 20) else 256)
    budget = max(int(0.7 * cap) - 2 * resident_bytes, 2 << 20)
    tm = min(M, tm_cap)
    while tm > 8 and 2 * tm * per_row_bytes > budget:
        tm //= 2
    if tm < M:
        tm = max(8, (tm // 8) * 8)   # non-full blocks must keep the sublane multiple of 8
    return tm


# ---------------------------------------------------------------------------
# 1) Query projection: x @ W, row-tiled, bf16-in / bf16-out, weight VMEM-resident.
#    (1/sqrt(dk) is already folded into W as dk**-0.25, see forward().)
# ---------------------------------------------------------------------------

def _project_kernel(x_ref, w_ref, o_ref):
    o_ref[...] = jnp.dot(x_ref[...], w_ref[...],
                         preferred_element_type=jnp.float32).astype(jnp.bfloat16)


def project(x, w):
    # x: (M, K) bf16, w: (K, N) bf16  ->  (M, N) bf16
    M, K = x.shape
    N = w.shape[1]
    cap = _vmem_capacity()
    w_bytes = K * N * 2
    per_row = K * 2 + N * 2 + N * 4            # in tile + out tile + f32 matmul result
    TM = _choose_tm(M, per_row, w_bytes, cap)
    est = 2 * TM * (K * 2 + N * 2) + 2 * w_bytes + TM * N * 4
    # NOTE: weight index never changes; pipeline_mode=pl.Buffered(1) would drop its second
    # buffer too, but bf16 already keeps it small enough everywhere we care about.
    return pl.pallas_call(
        _project_kernel,
        out_shape=jax.ShapeDtypeStruct((M, N), jnp.bfloat16),
        grid=(pl.cdiv(M, TM),),
        in_specs=[
            pl.BlockSpec((TM, K), lambda i: (i, 0)),
            pl.BlockSpec((K, N), lambda i: (0, 0)),   # bf16 weight, VMEM-resident
        ],
        out_specs=pl.BlockSpec((TM, N), lambda i: (i, 0)),
        compiler_params=_mosaic_params(("parallel",), est),
    )(x, w)


# ---------------------------------------------------------------------------
# 2) Co-attention: per (batch-tile, query-tile) grid point, heads sliced along lanes.
#    scores_h = q_h @ k_h^T (scale pre-folded) + mask_bias ; softmax over keys ;
#    p_mean = mean_h(p_h) ; out = p_mean @ v   (matches the torch non-multi-head path)
# ---------------------------------------------------------------------------

def _coattn_kernel(q_ref, k_ref, v_ref, bias_ref, o_ref, *, num_heads, head_dim):
    q = q_ref[...]                               # (TB, TQ, dim) bf16 (scale folded in)
    k = k_ref[...]                               # (TB, Lk, dim) bf16
    v = v_ref[...]                               # (TB, Lk, dv)  bf16
    bias = bias_ref[...]                         # (TB, 1, Lk)   f32 additive mask (-65504/0)

    acc = jnp.zeros((q.shape[0], q.shape[1], k.shape[1]), jnp.float32)  # head-summed probs
    # Static head loop; lane slices are a no-op relayout when head_dim is 128-aligned.
    for hh in range(num_heads):
        lo = hh * head_dim
        s = jnp.einsum('bqd,bkd->bqk', q[..., lo:lo + head_dim], k[..., lo:lo + head_dim],
                       preferred_element_type=jnp.float32)              # (TB, TQ, Lk)
        s = s + bias
        s_max = jnp.max(s, axis=-1, keepdims=True)
        e = jnp.exp(s - s_max)
        # fold the 1/num_heads of the head-mean into the softmax reciprocal (EUP, ~free)
        denom = jnp.sum(e, axis=-1, keepdims=True) * float(num_heads)
        acc = acc + e * pl.reciprocal(denom, approx=True)

    o_ref[...] = jnp.einsum('bqk,bkd->bqd', acc.astype(jnp.bfloat16), v,
                            preferred_element_type=jnp.float32).astype(jnp.bfloat16)


def coattn(q, k, v, bias, *, num_heads):
    # q: (B, Nq, dim) bf16 (data query rows only), k: (B, Lk, dim) bf16,
    # v: (B, Lk, dv) bf16, bias: (B, 1, Lk) f32  ->  (B, Nq, dv) bf16
    B, Nq, dim = q.shape
    Lk = k.shape[1]
    dv = v.shape[-1]
    head_dim = dim // num_heads
    cap = _vmem_capacity()

    tq_cap = 512 if cap >= (96 << 20) else 256
    TQ = Nq if Nq <= tq_cap else tq_cap

    def _per_b(tq):
        # streamed blocks (x2 double-buffer) + unrolled-head f32 softmax temps + P@V temp
        return (2 * tq * dim * 2 + 2 * Lk * dim * 2 + 2 * Lk * dv * 2 + 2 * Lk * 4
                + 2 * tq * dv * 2 + 4 * tq * Lk * 4 + tq * dv * 4)

    budget = max(int(0.7 * cap), 8 << 20)
    while TQ > 8 and _per_b(TQ) > budget:
        TQ = max(8, ((TQ // 2) // 8) * 8)
    TB = max(1, min(B, 8, budget // max(_per_b(TQ), 1)))   # batch tile: amortize per-step cost
    est = TB * _per_b(TQ)

    kernel = functools.partial(_coattn_kernel, num_heads=num_heads, head_dim=head_dim)
    return pl.pallas_call(
        kernel,
        out_shape=jax.ShapeDtypeStruct((B, Nq, dv), jnp.bfloat16),
        grid=(pl.cdiv(B, TB), pl.cdiv(Nq, TQ)),
        in_specs=[
            pl.BlockSpec((TB, TQ, dim), lambda b, qi: (b, qi, 0)),
            pl.BlockSpec((TB, Lk, dim), lambda b, qi: (b, 0, 0)),
            pl.BlockSpec((TB, Lk, dv), lambda b, qi: (b, 0, 0)),
            pl.BlockSpec((TB, 1, Lk), lambda b, qi: (b, 0, 0)),
        ],
        out_specs=pl.BlockSpec((TB, TQ, dv), lambda b, qi: (b, qi, 0)),
        compiler_params=_mosaic_params(("parallel", "parallel"), est),
    )(q, k, v, bias)


# ---------------------------------------------------------------------------
# 3) Fused FFN + residual, concat-free:
#    out = data + relu(data @ Wa + weighted @ Wb + b)     (dropout == identity in eval)
# ---------------------------------------------------------------------------

def _ffn_kernel(data_ref, wt_ref, wa_ref, wb_ref, b_ref, o_ref):
    x = data_ref[...]                            # (TM, d_out) f32 — FFN input + residual
    y = jnp.dot(x.astype(jnp.bfloat16), wa_ref[...], preferred_element_type=jnp.float32)
    y = y + jnp.dot(wt_ref[...], wb_ref[...], preferred_element_type=jnp.float32)
    y = jnp.maximum(y + b_ref[...], 0.0)
    o_ref[...] = x + y


def ffn_residual(data, weighted, wa, wb, b):
    # data: (M, d_out) f32, weighted: (M, d_other) bf16,
    # wa: (d_out, d_out) bf16, wb: (d_other, d_out) bf16, b: (1, d_out) f32
    M, d_out = data.shape
    d_other = weighted.shape[1]
    cap = _vmem_capacity()
    w_bytes = (d_out + d_other) * d_out * 2 + d_out * 4
    per_row = d_out * 4 + d_other * 2 + d_out * 4 + d_out * 2 + d_out * 4
    TM = _choose_tm(M, per_row, w_bytes, cap)
    est = 2 * TM * (d_out * 4 + d_other * 2 + d_out * 4) + 2 * w_bytes + TM * d_out * 6
    return pl.pallas_call(
        _ffn_kernel,
        out_shape=jax.ShapeDtypeStruct((M, d_out), jnp.float32),
        grid=(pl.cdiv(M, TM),),
        in_specs=[
            pl.BlockSpec((TM, d_out), lambda i: (i, 0)),
            pl.BlockSpec((TM, d_other), lambda i: (i, 0)),
            pl.BlockSpec((d_out, d_out), lambda i: (0, 0)),      # bf16 weights, VMEM-resident
            pl.BlockSpec((d_other, d_out), lambda i: (0, 0)),
            pl.BlockSpec((1, d_out), lambda i: (0, 0)),
        ],
        out_specs=pl.BlockSpec((TM, d_out), lambda i: (i, 0)),
        compiler_params=_mosaic_params(("parallel",), est),
    )(data, weighted, wa, wb, b)


# ---------------------------------------------------------------------------
# Parameter init (deterministic, mimics the PyTorch __init__ shapes)
# ---------------------------------------------------------------------------

def init_params(key, dim1, dim2, num_attn, num_none):
    dim = min(dim1, dim2)
    ks = jax.random.split(key, 8)

    def xavier(k, shape):
        fan_out, fan_in = shape
        bound = math.sqrt(6.0 / (fan_in + fan_out))
        return jax.random.uniform(k, shape, jnp.float32, -bound, bound)

    def linear_w(k, out_f, in_f):
        bound = 1.0 / math.sqrt(in_f)
        return jax.random.uniform(k, (out_f, in_f), jnp.float32, -bound, bound)

    def linear_b(k, out_f, in_f):
        bound = 1.0 / math.sqrt(in_f)
        return jax.random.uniform(k, (1, out_f), jnp.float32, -bound, bound)

    return {
        "none1": xavier(ks[0], (num_none, dim1)),          # (num_none, dim1)
        "none2": xavier(ks[1], (num_none, dim2)),          # (num_none, dim2)
        "proj_w1": linear_w(ks[2], dim, dim1).T,           # (dim1, dim) for x @ W
        "proj_w2": linear_w(ks[3], dim, dim2).T,           # (dim2, dim)
        "ffn_w1": linear_w(ks[4], dim1, dim1 + dim2).T,    # (dim1+dim2, dim1)
        "ffn_b1": linear_b(ks[5], dim1, dim1 + dim2),      # (1, dim1)
        "ffn_w2": linear_w(ks[6], dim2, dim1 + dim2).T,    # (dim1+dim2, dim2)
        "ffn_b2": linear_b(ks[7], dim2, dim1 + dim2),      # (1, dim2)
    }


# ---------------------------------------------------------------------------
# NormalSubLayer forward (glue in JAX, hot paths in Pallas)
# ---------------------------------------------------------------------------

def normal_sublayer_forward(params, data1, data2, mask1, mask2, num_attn, num_none):
    B, N1, d1 = data1.shape
    _, N2, d2 = data2.shape
    dim = params["proj_w1"].shape[1]
    h = num_attn
    dk = dim // h
    qscale = float(dk) ** -0.25   # folded into BOTH projection weights -> q.k carries 1/sqrt(dk)

    # --- DenseCoAttn: prepend the learned "none" slots; values in bf16 (MXU feed for both
    #     the projections and P@V, half the DMA/VMEM of f32) ---
    v1 = jnp.concatenate(
        [jnp.broadcast_to(params["none1"][None], (B, num_none, d1)), data1],
        axis=1).astype(jnp.bfloat16)                                     # (B, L1, d1)
    v2 = jnp.concatenate(
        [jnp.broadcast_to(params["none2"][None], (B, num_none, d2)), data2],
        axis=1).astype(jnp.bfloat16)                                     # (B, L2, d2)
    L1, L2 = v1.shape[1], v2.shape[1]

    none_mask = jnp.ones((B, num_none), mask1.dtype)
    m1 = jnp.concatenate([none_mask, mask1], axis=1).reshape(B, 1, L1)
    m2 = jnp.concatenate([none_mask, mask2], axis=1).reshape(B, 1, L2)
    bias1 = jnp.where(m1 == 0.0, -65504.0, 0.0).astype(jnp.float32)      # additive key bias
    bias2 = jnp.where(m2 == 0.0, -65504.0, 0.0).astype(jnp.float32)

    # Projection weights: bf16 once, scale pre-folded; heads stay packed along the lane dim.
    w1 = (params["proj_w1"] * qscale).astype(jnp.bfloat16)
    w2 = (params["proj_w2"] * qscale).astype(jnp.bfloat16)
    q1 = project(v1.reshape(B * L1, d1), w1).reshape(B, L1, dim)         # bf16
    q2 = project(v2.reshape(B * L2, d2), w2).reshape(B, L2, dim)         # bf16

    # Only data rows are ever used as queries (torch drops the first num_none rows of the
    # attention output) — slice the small bf16 query tensor instead of the big f32 output.
    q1d = q1[:, num_none:, :]                                            # (B, N1, dim)
    q2d = q2[:, num_none:, :]                                            # (B, N2, dim)

    # weighted1: stream-2 data queries attend over stream 1's keys/values
    w_attn1 = coattn(q2d, q1, v1, bias1, num_heads=h)                    # (B, N2, d1) bf16
    # weighted2: stream-1 data queries attend over stream 2's keys/values
    w_attn2 = coattn(q1d, q2, v2, bias2, num_heads=h)                    # (B, N1, d2) bf16

    # --- fused Linear + ReLU + residual, concat-free (split weight), bf16 weights ---
    wa1 = params["ffn_w1"][:d1].astype(jnp.bfloat16)
    wb1 = params["ffn_w1"][d1:].astype(jnp.bfloat16)
    wa2 = params["ffn_w2"][:d2].astype(jnp.bfloat16)
    wb2 = params["ffn_w2"][d2:].astype(jnp.bfloat16)

    out1 = ffn_residual(data1.reshape(B * N1, d1), w_attn2.reshape(B * N1, d2),
                        wa1, wb1, params["ffn_b1"]).reshape(B, N1, d1)
    out2 = ffn_residual(data2.reshape(B * N2, d2), w_attn1.reshape(B * N2, d1),
                        wa2, wb2, params["ffn_b2"]).reshape(B, N2, d2)
    return out1, out2


# ---------------------------------------------------------------------------
# Pure-JAX f32 reference (mirrors the PyTorch math) for validation
# ---------------------------------------------------------------------------

def reference_forward(params, data1, data2, mask1, mask2, num_attn, num_none):
    B, N1, d1 = data1.shape
    _, N2, d2 = data2.shape
    dim = params["proj_w1"].shape[1]
    h = num_attn
    dk = dim // h

    v1 = jnp.concatenate([jnp.broadcast_to(params["none1"][None], (B, num_none, d1)), data1], axis=1)
    v2 = jnp.concatenate([jnp.broadcast_to(params["none2"][None], (B, num_none, d2)), data2], axis=1)
    L1, L2 = v1.shape[1], v2.shape[1]
    none_mask = jnp.ones((B, num_none), data1.dtype)
    m1 = jnp.concatenate([none_mask, mask1], axis=1)[:, None, None, :]   # (B,1,1,L1)
    m2 = jnp.concatenate([none_mask, mask2], axis=1)[:, None, None, :]

    q1 = (v1 @ params["proj_w1"]).reshape(B, L1, h, dk).transpose(0, 2, 1, 3)
    q2 = (v2 @ params["proj_w2"]).reshape(B, L2, h, dk).transpose(0, 2, 1, 3)

    def attn(query, key, value, mask):
        scores = jnp.einsum('bhqd,bhkd->bhqk', query, key) / math.sqrt(dk)
        scores = jnp.where(mask == 0.0, -65504.0, scores)
        p = jax.nn.softmax(scores, axis=-1)
        return jnp.einsum('bhqk,bkd->bhqd', p, value)

    w1 = jnp.mean(attn(q2, q1, v1, m1), axis=1)[:, num_none:, :]
    w2 = jnp.mean(attn(q1, q2, v2, m2), axis=1)[:, num_none:, :]

    o1 = data1 + jnp.maximum(jnp.concatenate([data1, w2], -1) @ params["ffn_w1"] + params["ffn_b1"], 0.0)
    o2 = data2 + jnp.maximum(jnp.concatenate([data2, w1], -1) @ params["ffn_w2"] + params["ffn_b2"], 0.0)
    return o1, o2


# ---------------------------------------------------------------------------

if __name__ == "__main__":
    # Small shapes consistent with the module
    B, N1, N2 = 2, 8, 6
    dim1, dim2 = 32, 48
    num_attn, num_none = 4, 3

    key = jax.random.PRNGKey(0)
    kp, k1, k2 = jax.random.split(key, 3)
    params = init_params(kp, dim1, dim2, num_attn, num_none)

    data1 = jax.random.normal(k1, (B, N1, dim1), jnp.float32)
    data2 = jax.random.normal(k2, (B, N2, dim2), jnp.float32)
    mask1 = jnp.ones((B, N1), jnp.float32).at[1, -1].set(0.0)   # exercise masking
    mask2 = jnp.ones((B, N2), jnp.float32).at[0, -2].set(0.0)

    fwd = jax.jit(normal_sublayer_forward, static_argnames=("num_attn", "num_none"))
    out1, out2 = fwd(params, data1, data2, mask1, mask2,
                     num_attn=num_attn, num_none=num_none)
    out1, out2 = jax.block_until_ready(out1), jax.block_until_ready(out2)

    ref1, ref2 = reference_forward(params, data1, data2, mask1, mask2, num_attn, num_none)
    # bf16 MXU inputs (f32 accumulation) -> compare against the f32 reference at bf16 tolerance
    np.testing.assert_allclose(np.asarray(out1), np.asarray(ref1), rtol=2e-2, atol=2e-2)
    np.testing.assert_allclose(np.asarray(out2), np.asarray(ref2), rtol=2e-2, atol=2e-2)

    print("KERNEL_OK")
</pallas_src>

<mosaic_0001>
module attributes {stable_mosaic.version = 11 : i64} {
  func.func @_project_kernel(%arg0: i32, %arg1: memref<18x48xbf16, #tpu.memory_space<vmem>>, %arg2: memref<48x32xbf16, #tpu.memory_space<vmem>>, %arg3: memref<18x32xbf16, #tpu.memory_space<vmem>>) attributes {dimension_semantics = [#tpu.dimension_semantics<parallel>], iteration_bounds = array<i64: 1>, scalar_prefetch = 0 : i64, scratch_operands = 0 : i64, tpu.core_type = #tpu.core_type<tc>, window_params = [{transform_indices = @transform_0, window_bounds = array<i64: 18, 48>}, {pipeline_mode = #tpu.pipeline_mode<synchronous>, transform_indices = @transform_1, window_bounds = array<i64: 48, 32>}, {transform_indices = @transform_2, window_bounds = array<i64: 18, 32>}]} {
    %c0 = arith.constant 0 : index
    %c0_0 = arith.constant 0 : index
    %0 = vector.load %arg1[%c0, %c0_0] : memref<18x48xbf16, #tpu.memory_space<vmem>>, vector<18x48xbf16>
    %c0_1 = arith.constant 0 : index
    %c0_2 = arith.constant 0 : index
    %1 = vector.load %arg2[%c0_1, %c0_2] : memref<48x32xbf16, #tpu.memory_space<vmem>>, vector<48x32xbf16>
    %cst = arith.constant dense<0.000000e+00> : vector<18x32xf32>
    %2 = tpu.matmul %0, %1, %cst {dimension_numbers = #tpu.dot_dimension_numbers<[1], [0], [0], [1], [0, 0, 1, 1], [], []>} : vector<18x48xbf16>, vector<48x32xbf16>, vector<18x32xf32> -> vector<18x32xf32>
    %3 = arith.truncf %2 : vector<18x32xf32> to vector<18x32xbf16>
    %c0_3 = arith.constant 0 : index
    %c0_4 = arith.constant 0 : index
    %4 = vector.load %arg3[%c0_3, %c0_4] : memref<18x32xbf16, #tpu.memory_space<vmem>>, vector<18x32xbf16>
    tpu.vector_store %arg3[%c0_3, %c0_4], %3 {strides = array<i32>} : memref<18x32xbf16, #tpu.memory_space<vmem>>, vector<18x32xbf16>,
    return
  }
  func.func @transform_0(%arg0: i32) -> (i32, i32) {
    %c0_i32 = arith.constant 0 : i32
    %c0_i32_0 = arith.constant 0 : i32
    return %arg0, %c0_i32 : i32, i32
  }
  func.func @transform_1(%arg0: i32) -> (i32, i32) {
    %c0_i32 = arith.constant 0 : i32
    %c0_i32_0 = arith.constant 0 : i32
    %c0_i32_1 = arith.constant 0 : i32
    return %c0_i32, %c0_i32_0 : i32, i32
  }
  func.func @transform_2(%arg0: i32) -> (i32, i32) {
    %c0_i32 = arith.constant 0 : i32
    %c0_i32_0 = arith.constant 0 : i32
    return %arg0, %c0_i32 : i32, i32
  }
}

module attributes {stable_mosaic.version = 11 : i64} {
  func.func @_project_kernel(%arg0: i32, %arg1: memref<22x32xbf16, #tpu.memory_space<vmem>>, %arg2: memref<32x32xbf16, #tpu.memory_space<vmem>>, %arg3: memref<22x32xbf16, #tpu.memory_space<vmem>>) attributes {dimension_semantics = [#tpu.dimension_semantics<parallel>], iteration_bounds = array<i64: 1>, scalar_prefetch = 0 : i64, scratch_operands = 0 : i64, tpu.core_type = #tpu.core_type<tc>, window_params = [{transform_indices = @transform_0, window_bounds = array<i64: 22, 32>}, {pipeline_mode = #tpu.pipeline_mode<synchronous>, transform_indices = @transform_1, window_bounds = array<i64: 32, 32>}, {transform_indices = @transform_2, window_bounds = array<i64: 22, 32>}]} {
    %c0 = arith.constant 0 : index
    %c0_0 = arith.constant 0 : index
    %0 = vector.load %arg1[%c0, %c0_0] : memref<22x32xbf16, #tpu.memory_space<vmem>>, vector<22x32xbf16>
    %c0_1 = arith.constant 0 : index
    %c0_2 = arith.constant 0 : index
    %1 = vector.load %arg2[%c0_1, %c0_2] : memref<32x32xbf16, #tpu.memory_space<vmem>>, vector<32x32xbf16>
    %cst = arith.constant dense<0.000000e+00> : vector<22x32xf32>
    %2 = tpu.matmul %0, %1, %cst {dimension_numbers = #tpu.dot_dimension_numbers<[1], [0], [0], [1], [0, 0, 1, 1], [], []>} : vector<22x32xbf16>, vector<32x32xbf16>, vector<22x32xf32> -> vector<22x32xf32>
    %3 = arith.truncf %2 : vector<22x32xf32> to vector<22x32xbf16>
    %c0_3 = arith.constant 0 : index
    %c0_4 = arith.constant 0 : index
    %4 = vector.load %arg3[%c0_3, %c0_4] : memref<22x32xbf16, #tpu.memory_space<vmem>>, vector<22x32xbf16>
    tpu.vector_store %arg3[%c0_3, %c0_4], %3 {strides = array<i32>} : memref<22x32xbf16, #tpu.memory_space<vmem>>, vector<22x32xbf16>,
    return
  }
  func.func @transform_0(%arg0: i32) -> (i32, i32) {
    %c0_i32 = arith.constant 0 : i32
    %c0_i32_0 = arith.constant 0 : i32
    return %arg0, %c0_i32 : i32, i32
  }
  func.func @transform_1(%arg0: i32) -> (i32, i32) {
    %c0_i32 = arith.constant 0 : i32
    %c0_i32_0 = arith.constant 0 : i32
    %c0_i32_1 = arith.constant 0 : i32
    return %c0_i32, %c0_i32_0 : i32, i32
  }
  func.func @transform_2(%arg0: i32) -> (i32, i32) {
    %c0_i32 = arith.constant 0 : i32
    %c0_i32_0 = arith.constant 0 : i32
    return %arg0, %c0_i32 : i32, i32
  }
}

module attributes {stable_mosaic.version = 11 : i64} {
  func.func @_coattn_kernel(%arg0: i32, %arg1: i32, %arg2: memref<2x6x32xbf16, #tpu.memory_space<vmem>>, %arg3: memref<2x11x32xbf16, #tpu.memory_space<vmem>>, %arg4: memref<2x11x32xbf16, #tpu.memory_space<vmem>>, %arg5: memref<2x1x11xf32, #tpu.memory_space<vmem>>, %arg6: memref<2x6x32xbf16, #tpu.memory_space<vmem>>) attributes {dimension_semantics = [#tpu.dimension_semantics<parallel>, #tpu.dimension_semantics<parallel>], iteration_bounds = array<i64: 1, 1>, scalar_prefetch = 0 : i64, scratch_operands = 0 : i64, tpu.core_type = #tpu.core_type<tc>, window_params = [{transform_indices = @transform_0, window_bounds = array<i64: 2, 6, 32>}, {transform_indices = @transform_1, window_bounds = array<i64: 2, 11, 32>}, {transform_indices = @transform_2, window_bounds = array<i64: 2, 11, 32>}, {transform_indices = @transform_3, window_bounds = array<i64: 2, 1, 11>}, {transform_indices = @transform_4, window_bounds = array<i64: 2, 6, 32>}]} {
    %c0 = arith.constant 0 : index
    %c0_0 = arith.constant 0 : index
    %c0_1 = arith.constant 0 : index
    %0 = vector.load %arg2[%c0, %c0_0, %c0_1] : memref<2x6x32xbf16, #tpu.memory_space<vmem>>, vector<2x6x32xbf16>
    %c0_2 = arith.constant 0 : index
    %c0_3 = arith.constant 0 : index
    %c0_4 = arith.constant 0 : index
    %1 = vector.load %arg3[%c0_2, %c0_3, %c0_4] : memref<2x11x32xbf16, #tpu.memory_space<vmem>>, vector<2x11x32xbf16>
    %c0_5 = arith.constant 0 : index
    %c0_6 = arith.constant 0 : index
    %c0_7 = arith.constant 0 : index
    %2 = vector.load %arg4[%c0_5, %c0_6, %c0_7] : memref<2x11x32xbf16, #tpu.memory_space<vmem>>, vector<2x11x32xbf16>
    %c0_8 = arith.constant 0 : index
    %c0_9 = arith.constant 0 : index
    %c0_10 = arith.constant 0 : index
    %3 = vector.load %arg5[%c0_8, %c0_9, %c0_10] : memref<2x1x11xf32, #tpu.memory_space<vmem>>, vector<2x1x11xf32>
    %cst = arith.constant 0.000000e+00 : f32
    %4 = vector.broadcast %cst : f32 to vector<2x6x11xf32>
    %5 = vector.extract_strided_slice %0 {offsets = [0, 0, 0], sizes = [2, 6, 8], strides = [1, 1, 1]} : vector<2x6x32xbf16> to vector<2x6x8xbf16>
    %6 = vector.extract_strided_slice %1 {offsets = [0, 0, 0], sizes = [2, 11, 8], strides = [1, 1, 1]} : vector<2x11x32xbf16> to vector<2x11x8xbf16>
    "tpu.trace_start"() <{level = 10 : i32, message = "bqd,bkd->bqk"}> : () -> ()
    %cst_11 = arith.constant dense<0.000000e+00> : vector<2x6x11xf32>
    %7 = tpu.matmul %5, %6, %cst_11 {dimension_numbers = #tpu.dot_dimension_numbers<[2], [2], [1], [1], [0, 0, 0, 1, 1, 1], [0], [0]>} : vector<2x6x8xbf16>, vector<2x11x8xbf16>, vector<2x6x11xf32> -> vector<2x6x11xf32>
    "tpu.trace_stop"() : () -> ()
    %8 = vector.broadcast %3 : vector<2x1x11xf32> to vector<2x6x11xf32>
    %9 = arith.addf %7, %8 : vector<2x6x11xf32>
    %cst_12 = arith.constant dense<0xFF800000> : vector<2x6xf32>
    %10 = vector.multi_reduction <maximumf>, %9, %cst_12 [2] : vector<2x6x11xf32> to vector<2x6xf32>
    %11 = vector.shape_cast %10 : vector<2x6xf32> to vector<2x6x1xf32>
    %12 = vector.broadcast %11 : vector<2x6x1xf32> to vector<2x6x11xf32>
    %13 = arith.subf %9, %12 : vector<2x6x11xf32>
    %14 = math.exp %13 : vector<2x6x11xf32>
    %cst_13 = arith.constant dense<0.000000e+00> : vector<2x6xf32>
    %15 = vector.multi_reduction <add>, %14, %cst_13 [2] : vector<2x6x11xf32> to vector<2x6xf32>
    %16 = vector.shape_cast %15 : vector<2x6xf32> to vector<2x6x1xf32>
    %cst_14 = arith.constant 4.000000e+00 : f32
    %17 = vector.broadcast %cst_14 : f32 to vector<2x6x1xf32>
    %18 = arith.mulf %16, %17 : vector<2x6x1xf32>
    %19 = tpu.reciprocal %18 {approx = true} : vector<2x6x1xf32> -> vector<2x6x1xf32>
    %20 = vector.broadcast %19 : vector<2x6x1xf32> to vector<2x6x11xf32>
    %21 = arith.mulf %14, %20 : vector<2x6x11xf32>
    %22 = arith.addf %4, %21 : vector<2x6x11xf32>
    %23 = vector.extract_strided_slice %0 {offsets = [0, 0, 8], sizes = [2, 6, 8], strides = [1, 1, 1]} : vector<2x6x32xbf16> to vector<2x6x8xbf16>
    %24 = vector.extract_strided_slice %1 {offsets = [0, 0, 8], sizes = [2, 11, 8], strides = [1, 1, 1]} : vector<2x11x32xbf16> to vector<2x11x8xbf16>
    "tpu.trace_start"() <{level = 10 : i32, message = "bqd,bkd->bqk"}> : () -> ()
    %cst_15 = arith.constant dense<0.000000e+00> : vector<2x6x11xf32>
    %25 = tpu.matmul %23, %24, %cst_15 {dimension_numbers = #tpu.dot_dimension_numbers<[2], [2], [1], [1], [0, 0, 0, 1, 1, 1], [0], [0]>} : vector<2x6x8xbf16>, vector<2x11x8xbf16>, vector<2x6x11xf32> -> vector<2x6x11xf32>
    "tpu.trace_stop"() : () -> ()
    %26 = vector.broadcast %3 : vector<2x1x11xf32> to vector<2x6x11xf32>
    %27 = arith.addf %25, %26 : vector<2x6x11xf32>
    %cst_16 = arith.constant dense<0xFF800000> : vector<2x6xf32>
    %28 = vector.multi_reduction <maximumf>, %27, %cst_16 [2] : vector<2x6x11xf32> to vector<2x6xf32>
    %29 = vector.shape_cast %28 : vector<2x6xf32> to vector<2x6x1xf32>
    %30 = vector.broadcast %29 : vector<2x6x1xf32> to vector<2x6x11xf32>
    %31 = arith.subf %27, %30 : vector<2x6x11xf32>
    %32 = math.exp %31 : vector<2x6x11xf32>
    %cst_17 = arith.constant dense<0.000000e+00> : vector<2x6xf32>
    %33 = vector.multi_reduction <add>, %32, %cst_17 [2] : vector<2x6x11xf32> to vector<2x6xf32>
    %34 = vector.shape_cast %33 : vector<2x6xf32> to vector<2x6x1xf32>
    %cst_18 = arith.constant 4.000000e+00 : f32
    %35 = vector.broadcast %cst_18 : f32 to vector<2x6x1xf32>
    %36 = arith.mulf %34, %35 : vector<2x6x1xf32>
    %37 = tpu.reciprocal %36 {approx = true} : vector<2x6x1xf32> -> vector<2x6x1xf32>
    %38 = vector.broadcast %37 : vector<2x6x1xf32> to vector<2x6x11xf32>
    %39 = arith.mulf %32, %38 : vector<2x6x11xf32>
    %40 = arith.addf %22, %39 : vector<2x6x11xf32>
    %41 = vector.extract_strided_slice %0 {offsets = [0, 0, 16], sizes = [2, 6, 8], strides = [1, 1, 1]} : vector<2x6x32xbf16> to vector<2x6x8xbf16>
    %42 = vector.extract_strided_slice %1 {offsets = [0, 0, 16], sizes = [2, 11, 8], strides = [1, 1, 1]} : vector<2x11x32xbf16> to vector<2x11x8xbf16>
    "tpu.trace_start"() <{level = 10 : i32, message = "bqd,bkd->bqk"}> : () -> ()
    %cst_19 = arith.constant dense<0.000000e+00> : vector<2x6x11xf32>
    %43 = tpu.matmul %41, %42, %cst_19 {dimension_numbers = #tpu.dot_dimension_numbers<[2], [2], [1], [1], [0, 0, 0, 1, 1, 1], [0], [0]>} : vector<2x6x8xbf16>, vector<2x11x8xbf16>, vector<2x6x11xf32> -> vector<2x6x11xf32>
    "tpu.trace_stop"() : () -> ()
    %44 = vector.broadcast %3 : vector<2x1x11xf32> to vector<2x6x11xf32>
    %45 = arith.addf %43, %44 : vector<2x6x11xf32>
    %cst_20 = arith.constant dense<0xFF800000> : vector<2x6xf32>
    %46 = vector.multi_reduction <maximumf>, %45, %cst_20 [2] : vector<2x6x11xf32> to vector<2x6xf32>
    %47 = vector.shape_cast %46 : vector<2x6xf32> to vector<2x6x1xf32>
    %48 = vector.broadcast %47 : vector<2x6x1xf32> to vector<2x6x11xf32>
    %49 = arith.subf %45, %48 : vector<2x6x11xf32>
    %50 = math.exp %49 : vector<2x6x11xf32>
    %cst_21 = arith.constant dense<0.000000e+00> : vector<2x6xf32>
    %51 = vector.multi_reduction <add>, %50, %cst_21 [2] : vector<2x6x11xf32> to vector<2x6xf32>
    %52 = vector.shape_cast %51 : vector<2x6xf32> to vector<2x6x1xf32>
    %cst_22 = arith.constant 4.000000e+00 : f32
    %53 = vector.broadcast %cst_22 : f32 to vector<2x6x1xf32>
    %54 = arith.mulf %52, %53 : vector<2x6x1xf32>
    %55 = tpu.reciprocal %54 {approx = true} : vector<2x6x1xf32> -> vector<2x6x1xf32>
    %56 = vector.broadcast %55 : vector<2x6x1xf32> to vector<2x6x11xf32>
    %57 = arith.mulf %50, %56 : vector<2x6x11xf32>
    %58 = arith.addf %40, %57 : vector<2x6x11xf32>
    %59 = vector.extract_strided_slice %0 {offsets = [0, 0, 24], sizes = [2, 6, 8], strides = [1, 1, 1]} : vector<2x6x32xbf16> to vector<2x6x8xbf16>
    %60 = vector.extract_strided_slice %1 {offsets = [0, 0, 24], sizes = [2, 11, 8], strides = [1, 1, 1]} : vector<2x11x32xbf16> to vector<2x11x8xbf16>
    "tpu.trace_start"() <{level = 10 : i32, message = "bqd,bkd->bqk"}> : () -> ()
    %cst_23 = arith.constant dense<0.000000e+00> : vector<2x6x11xf32>
    %61 = tpu.matmul %59, %60, %cst_23 {dimension_numbers = #tpu.dot_dimension_numbers<[2], [2], [1], [1], [0, 0, 0, 1, 1, 1], [0], [0]>} : vector<2x6x8xbf16>, vector<2x11x8xbf16>, vector<2x6x11xf32> -> vector<2x6x11xf32>
    "tpu.trace_stop"() : () -> ()
    %62 = vector.broadcast %3 : vector<2x1x11xf32> to vector<2x6x11xf32>
    %63 = arith.addf %61, %62 : vector<2x6x11xf32>
    %cst_24 = arith.constant dense<0xFF800000> : vector<2x6xf32>
    %64 = vector.multi_reduction <maximumf>, %63, %cst_24 [2] : vector<2x6x11xf32> to vector<2x6xf32>
    %65 = vector.shape_cast %64 : vector<2x6xf32> to vector<2x6x1xf32>
    %66 = vector.broadcast %65 : vector<2x6x1xf32> to vector<2x6x11xf32>
    %67 = arith.subf %63, %66 : vector<2x6x11xf32>
    %68 = math.exp %67 : vector<2x6x11xf32>
    %cst_25 = arith.constant dense<0.000000e+00> : vector<2x6xf32>
    %69 = vector.multi_reduction <add>, %68, %cst_25 [2] : vector<2x6x11xf32> to vector<2x6xf32>
    %70 = vector.shape_cast %69 : vector<2x6xf32> to vector<2x6x1xf32>
    %cst_26 = arith.constant 4.000000e+00 : f32
    %71 = vector.broadcast %cst_26 : f32 to vector<2x6x1xf32>
    %72 = arith.mulf %70, %71 : vector<2x6x1xf32>
    %73 = tpu.reciprocal %72 {approx = true} : vector<2x6x1xf32> -> vector<2x6x1xf32>
    %74 = vector.broadcast %73 : vector<2x6x1xf32> to vector<2x6x11xf32>
    %75 = arith.mulf %68, %74 : vector<2x6x11xf32>
    %76 = arith.addf %58, %75 : vector<2x6x11xf32>
    %77 = arith.truncf %76 : vector<2x6x11xf32> to vector<2x6x11xbf16>
    "tpu.trace_start"() <{level = 10 : i32, message = "bqk,bkd->bqd"}> : () -> ()
    %cst_27 = arith.constant dense<0.000000e+00> : vector<2x6x32xf32>
    %78 = tpu.matmul %77, %2, %cst_27 {dimension_numbers = #tpu.dot_dimension_numbers<[2], [1], [1], [2], [0, 0, 0, 1, 1, 2], [0], [0]>} : vector<2x6x11xbf16>, vector<2x11x32xbf16>, vector<2x6x32xf32> -> vector<2x6x32xf32>
    "tpu.trace_stop"() : () -> ()
    %79 = arith.truncf %78 : vector<2x6x32xf32> to vector<2x6x32xbf16>
    %c0_28 = arith.constant 0 : index
    %c0_29 = arith.constant 0 : index
    %c0_30 = arith.constant 0 : index
    %80 = vector.load %arg6[%c0_28, %c0_29, %c0_30] : memref<2x6x32xbf16, #tpu.memory_space<vmem>>, vector<2x6x32xbf16>
    tpu.vector_store %arg6[%c0_28, %c0_29, %c0_30], %79 {strides = array<i32>} : memref<2x6x32xbf16, #tpu.memory_space<vmem>>, vector<2x6x32xbf16>,
    return
  }
  func.func @transform_0(%arg0: i32, %arg1: i32) -> (i32, i32, i32) {
    %c0_i32 = arith.constant 0 : i32
    %c0_i32_0 = arith.constant 0 : i32
    return %arg0, %arg1, %c0_i32 : i32, i32, i32
  }
  func.func @transform_1(%arg0: i32, %arg1: i32) -> (i32, i32, i32) {
    %c0_i32 = arith.constant 0 : i32
    %c0_i32_0 = arith.constant 0 : i32
    %c0_i32_1 = arith.constant 0 : i32
    return %arg0, %c0_i32, %c0_i32_0 : i32, i32, i32
  }
  func.func @transform_2(%arg0: i32, %arg1: i32) -> (i32, i32, i32) {
    %c0_i32 = arith.constant 0 : i32
    %c0_i32_0 = arith.constant 0 : i32
    %c0_i32_1 = arith.constant 0 : i32
    return %arg0, %c0_i32, %c0_i32_0 : i32, i32, i32
  }
  func.func @transform_3(%arg0: i32, %arg1: i32) -> (i32, i32, i32) {
    %c0_i32 = arith.constant 0 : i32
    %c0_i32_0 = arith.constant 0 : i32
    %c0_i32_1 = arith.constant 0 : i32
    return %arg0, %c0_i32, %c0_i32_0 : i32, i32, i32
  }
  func.func @transform_4(%arg0: i32, %arg1: i32) -> (i32, i32, i32) {
    %c0_i32 = arith.constant 0 : i32
    %c0_i32_0 = arith.constant 0 : i32
    return %arg0, %arg1, %c0_i32 : i32, i32, i32
  }
}

module attributes {stable_mosaic.version = 11 : i64} {
  func.func @_ffn_kernel(%arg0: i32, %arg1: memref<12x48xf32, #tpu.memory_space<vmem>>, %arg2: memref<12x32xbf16, #tpu.memory_space<vmem>>, %arg3: memref<48x48xbf16, #tpu.memory_space<vmem>>, %arg4: memref<32x48xbf16, #tpu.memory_space<vmem>>, %arg5: memref<1x48xf32, #tpu.memory_space<vmem>>, %arg6: memref<12x48xf32, #tpu.memory_space<vmem>>) attributes {dimension_semantics = [#tpu.dimension_semantics<parallel>], iteration_bounds = array<i64: 1>, scalar_prefetch = 0 : i64, scratch_operands = 0 : i64, tpu.core_type = #tpu.core_type<tc>, window_params = [{transform_indices = @transform_0, window_bounds = array<i64: 12, 48>}, {transform_indices = @transform_1, window_bounds = array<i64: 12, 32>}, {pipeline_mode = #tpu.pipeline_mode<synchronous>, transform_indices = @transform_2, window_bounds = array<i64: 48, 48>}, {pipeline_mode = #tpu.pipeline_mode<synchronous>, transform_indices = @transform_3, window_bounds = array<i64: 32, 48>}, {pipeline_mode = #tpu.pipeline_mode<synchronous>, transform_indices = @transform_4, window_bounds = array<i64: 1, 48>}, {transform_indices = @transform_5, window_bounds = array<i64: 12, 48>}]} {
    %c0 = arith.constant 0 : index
    %c0_0 = arith.constant 0 : index
    %0 = vector.load %arg1[%c0, %c0_0] : memref<12x48xf32, #tpu.memory_space<vmem>>, vector<12x48xf32>
    %1 = arith.truncf %0 : vector<12x48xf32> to vector<12x48xbf16>
    %c0_1 = arith.constant 0 : index
    %c0_2 = arith.constant 0 : index
    %2 = vector.load %arg3[%c0_1, %c0_2] : memref<48x48xbf16, #tpu.memory_space<vmem>>, vector<48x48xbf16>
    %cst = arith.constant dense<0.000000e+00> : vector<12x48xf32>
    %3 = tpu.matmul %1, %2, %cst {dimension_numbers = #tpu.dot_dimension_numbers<[1], [0], [0], [1], [0, 0, 1, 1], [], []>} : vector<12x48xbf16>, vector<48x48xbf16>, vector<12x48xf32> -> vector<12x48xf32>
    %c0_3 = arith.constant 0 : index
    %c0_4 = arith.constant 0 : index
    %4 = vector.load %arg2[%c0_3, %c0_4] : memref<12x32xbf16, #tpu.memory_space<vmem>>, vector<12x32xbf16>
    %c0_5 = arith.constant 0 : index
    %c0_6 = arith.constant 0 : index
    %5 = vector.load %arg4[%c0_5, %c0_6] : memref<32x48xbf16, #tpu.memory_space<vmem>>, vector<32x48xbf16>
    %cst_7 = arith.constant dense<0.000000e+00> : vector<12x48xf32>
    %6 = tpu.matmul %4, %5, %cst_7 {dimension_numbers = #tpu.dot_dimension_numbers<[1], [0], [0], [1], [0, 0, 1, 1], [], []>} : vector<12x32xbf16>, vector<32x48xbf16>, vector<12x48xf32> -> vector<12x48xf32>
    %7 = arith.addf %3, %6 : vector<12x48xf32>
    %c0_8 = arith.constant 0 : index
    %c0_9 = arith.constant 0 : index
    %8 = vector.load %arg5[%c0_8, %c0_9] : memref<1x48xf32, #tpu.memory_space<vmem>>, vector<1x48xf32>
    %9 = vector.broadcast %8 : vector<1x48xf32> to vector<12x48xf32>
    %10 = arith.addf %7, %9 : vector<12x48xf32>
    %cst_10 = arith.constant 0.000000e+00 : f32
    %11 = vector.broadcast %cst_10 : f32 to vector<12x48xf32>
    %12 = arith.maximumf %10, %11 : vector<12x48xf32>
    %13 = arith.addf %0, %12 : vector<12x48xf32>
    %c0_11 = arith.constant 0 : index
    %c0_12 = arith.constant 0 : index
    %14 = vector.load %arg6[%c0_11, %c0_12] : memref<12x48xf32, #tpu.memory_space<vmem>>, vector<12x48xf32>
    tpu.vector_store %arg6[%c0_11, %c0_12], %13 {strides = array<i32>} : memref<12x48xf32, #tpu.memory_space<vmem>>, vector<12x48xf32>,
    return
  }
  func.func @transform_0(%arg0: i32) -> (i32, i32) {
    %c0_i32 = arith.constant 0 : i32
    %c0_i32_0 = arith.constant 0 : i32
    return %arg0, %c0_i32 : i32, i32
  }
  func.func @transform_1(%arg0: i32) -> (i32, i32) {
    %c0_i32 = arith.constant 0 : i32
    %c0_i32_0 = arith.constant 0 : i32
    return %arg0, %c0_i32 : i32, i32
  }
  func.func @transform_2(%arg0: i32) -> (i32, i32) {
    %c0_i32 = arith.constant 0 : i32
    %c0_i32_0 = arith.constant 0 : i32
    %c0_i32_1 = arith.constant 0 : i32
    return %c0_i32, %c0_i32_0 : i32, i32
  }
  func.func @transform_3(%arg0: i32) -> (i32, i32) {
    %c0_i32 = arith.constant 0 : i32
    %c0_i32_0 = arith.constant 0 : i32
    %c0_i32_1 = arith.constant 0 : i32
    return %c0_i32, %c0_i32_0 : i32, i32
  }
  func.func @transform_4(%arg0: i32) -> (i32, i32) {
    %c0_i32 = arith.constant 0 : i32
    %c0_i32_0 = arith.constant 0 : i32
    %c0_i32_1 = arith.constant 0 : i32
    return %c0_i32, %c0_i32_0 : i32, i32
  }
  func.func @transform_5(%arg0: i32) -> (i32, i32) {
    %c0_i32 = arith.constant 0 : i32
    %c0_i32_0 = arith.constant 0 : i32
    return %arg0, %c0_i32 : i32, i32
  }
}

module attributes {stable_mosaic.version = 11 : i64} {
  func.func @_coattn_kernel(%arg0: i32, %arg1: i32, %arg2: memref<2x8x32xbf16, #tpu.memory_space<vmem>>, %arg3: memref<2x9x32xbf16, #tpu.memory_space<vmem>>, %arg4: memref<2x9x48xbf16, #tpu.memory_space<vmem>>, %arg5: memref<2x1x9xf32, #tpu.memory_space<vmem>>, %arg6: memref<2x8x48xbf16, #tpu.memory_space<vmem>>) attributes {dimension_semantics = [#tpu.dimension_semantics<parallel>, #tpu.dimension_semantics<parallel>], iteration_bounds = array<i64: 1, 1>, scalar_prefetch = 0 : i64, scratch_operands = 0 : i64, tpu.core_type = #tpu.core_type<tc>, window_params = [{transform_indices = @transform_0, window_bounds = array<i64: 2, 8, 32>}, {transform_indices = @transform_1, window_bounds = array<i64: 2, 9, 32>}, {transform_indices = @transform_2, window_bounds = array<i64: 2, 9, 48>}, {transform_indices = @transform_3, window_bounds = array<i64: 2, 1, 9>}, {transform_indices = @transform_4, window_bounds = array<i64: 2, 8, 48>}]} {
    %c0 = arith.constant 0 : index
    %c0_0 = arith.constant 0 : index
    %c0_1 = arith.constant 0 : index
    %0 = vector.load %arg2[%c0, %c0_0, %c0_1] : memref<2x8x32xbf16, #tpu.memory_space<vmem>>, vector<2x8x32xbf16>
    %c0_2 = arith.constant 0 : index
    %c0_3 = arith.constant 0 : index
    %c0_4 = arith.constant 0 : index
    %1 = vector.load %arg3[%c0_2, %c0_3, %c0_4] : memref<2x9x32xbf16, #tpu.memory_space<vmem>>, vector<2x9x32xbf16>
    %c0_5 = arith.constant 0 : index
    %c0_6 = arith.constant 0 : index
    %c0_7 = arith.constant 0 : index
    %2 = vector.load %arg4[%c0_5, %c0_6, %c0_7] : memref<2x9x48xbf16, #tpu.memory_space<vmem>>, vector<2x9x48xbf16>
    %c0_8 = arith.constant 0 : index
    %c0_9 = arith.constant 0 : index
    %c0_10 = arith.constant 0 : index
    %3 = vector.load %arg5[%c0_8, %c0_9, %c0_10] : memref<2x1x9xf32, #tpu.memory_space<vmem>>, vector<2x1x9xf32>
    %cst = arith.constant 0.000000e+00 : f32
    %4 = vector.broadcast %cst : f32 to vector<2x8x9xf32>
    %5 = vector.extract_strided_slice %0 {offsets = [0, 0, 0], sizes = [2, 8, 8], strides = [1, 1, 1]} : vector<2x8x32xbf16> to vector<2x8x8xbf16>
    %6 = vector.extract_strided_slice %1 {offsets = [0, 0, 0], sizes = [2, 9, 8], strides = [1, 1, 1]} : vector<2x9x32xbf16> to vector<2x9x8xbf16>
    "tpu.trace_start"() <{level = 10 : i32, message = "bqd,bkd->bqk"}> : () -> ()
    %cst_11 = arith.constant dense<0.000000e+00> : vector<2x8x9xf32>
    %7 = tpu.matmul %5, %6, %cst_11 {dimension_numbers = #tpu.dot_dimension_numbers<[2], [2], [1], [1], [0, 0, 0, 1, 1, 1], [0], [0]>} : vector<2x8x8xbf16>, vector<2x9x8xbf16>, vector<2x8x9xf32> -> vector<2x8x9xf32>
    "tpu.trace_stop"() : () -> ()
    %8 = vector.broadcast %3 : vector<2x1x9xf32> to vector<2x8x9xf32>
    %9 = arith.addf %7, %8 : vector<2x8x9xf32>
    %cst_12 = arith.constant dense<0xFF800000> : vector<2x8xf32>
    %10 = vector.multi_reduction <maximumf>, %9, %cst_12 [2] : vector<2x8x9xf32> to vector<2x8xf32>
    %11 = vector.shape_cast %10 : vector<2x8xf32> to vector<2x8x1xf32>
    %12 = vector.broadcast %11 : vector<2x8x1xf32> to vector<2x8x9xf32>
    %13 = arith.subf %9, %12 : vector<2x8x9xf32>
    %14 = math.exp %13 : vector<2x8x9xf32>
    %cst_13 = arith.constant dense<0.000000e+00> : vector<2x8xf32>
    %15 = vector.multi_reduction <add>, %14, %cst_13 [2] : vector<2x8x9xf32> to vector<2x8xf32>
    %16 = vector.shape_cast %15 : vector<2x8xf32> to vector<2x8x1xf32>
    %cst_14 = arith.constant 4.000000e+00 : f32
    %17 = vector.broadcast %cst_14 : f32 to vector<2x8x1xf32>
    %18 = arith.mulf %16, %17 : vector<2x8x1xf32>
    %19 = tpu.reciprocal %18 {approx = true} : vector<2x8x1xf32> -> vector<2x8x1xf32>
    %20 = vector.broadcast %19 : vector<2x8x1xf32> to vector<2x8x9xf32>
    %21 = arith.mulf %14, %20 : vector<2x8x9xf32>
    %22 = arith.addf %4, %21 : vector<2x8x9xf32>
    %23 = vector.extract_strided_slice %0 {offsets = [0, 0, 8], sizes = [2, 8, 8], strides = [1, 1, 1]} : vector<2x8x32xbf16> to vector<2x8x8xbf16>
    %24 = vector.extract_strided_slice %1 {offsets = [0, 0, 8], sizes = [2, 9, 8], strides = [1, 1, 1]} : vector<2x9x32xbf16> to vector<2x9x8xbf16>
    "tpu.trace_start"() <{level = 10 : i32, message = "bqd,bkd->bqk"}> : () -> ()
    %cst_15 = arith.constant dense<0.000000e+00> : vector<2x8x9xf32>
    %25 = tpu.matmul %23, %24, %cst_15 {dimension_numbers = #tpu.dot_dimension_numbers<[2], [2], [1], [1], [0, 0, 0, 1, 1, 1], [0], [0]>} : vector<2x8x8xbf16>, vector<2x9x8xbf16>, vector<2x8x9xf32> -> vector<2x8x9xf32>
    "tpu.trace_stop"() : () -> ()
    %26 = vector.broadcast %3 : vector<2x1x9xf32> to vector<2x8x9xf32>
    %27 = arith.addf %25, %26 : vector<2x8x9xf32>
    %cst_16 = arith.constant dense<0xFF800000> : vector<2x8xf32>
    %28 = vector.multi_reduction <maximumf>, %27, %cst_16 [2] : vector<2x8x9xf32> to vector<2x8xf32>
    %29 = vector.shape_cast %28 : vector<2x8xf32> to vector<2x8x1xf32>
    %30 = vector.broadcast %29 : vector<2x8x1xf32> to vector<2x8x9xf32>
    %31 = arith.subf %27, %30 : vector<2x8x9xf32>
    %32 = math.exp %31 : vector<2x8x9xf32>
    %cst_17 = arith.constant dense<0.000000e+00> : vector<2x8xf32>
    %33 = vector.multi_reduction <add>, %32, %cst_17 [2] : vector<2x8x9xf32> to vector<2x8xf32>
    %34 = vector.shape_cast %33 : vector<2x8xf32> to vector<2x8x1xf32>
    %cst_18 = arith.constant 4.000000e+00 : f32
    %35 = vector.broadcast %cst_18 : f32 to vector<2x8x1xf32>
    %36 = arith.mulf %34, %35 : vector<2x8x1xf32>
    %37 = tpu.reciprocal %36 {approx = true} : vector<2x8x1xf32> -> vector<2x8x1xf32>
    %38 = vector.broadcast %37 : vector<2x8x1xf32> to vector<2x8x9xf32>
    %39 = arith.mulf %32, %38 : vector<2x8x9xf32>
    %40 = arith.addf %22, %39 : vector<2x8x9xf32>
    %41 = vector.extract_strided_slice %0 {offsets = [0, 0, 16], sizes = [2, 8, 8], strides = [1, 1, 1]} : vector<2x8x32xbf16> to vector<2x8x8xbf16>
    %42 = vector.extract_strided_slice %1 {offsets = [0, 0, 16], sizes = [2, 9, 8], strides = [1, 1, 1]} : vector<2x9x32xbf16> to vector<2x9x8xbf16>
    "tpu.trace_start"() <{level = 10 : i32, message = "bqd,bkd->bqk"}> : () -> ()
    %cst_19 = arith.constant dense<0.000000e+00> : vector<2x8x9xf32>
    %43 = tpu.matmul %41, %42, %cst_19 {dimension_numbers = #tpu.dot_dimension_numbers<[2], [2], [1], [1], [0, 0, 0, 1, 1, 1], [0], [0]>} : vector<2x8x8xbf16>, vector<2x9x8xbf16>, vector<2x8x9xf32> -> vector<2x8x9xf32>
    "tpu.trace_stop"() : () -> ()
    %44 = vector.broadcast %3 : vector<2x1x9xf32> to vector<2x8x9xf32>
    %45 = arith.addf %43, %44 : vector<2x8x9xf32>
    %cst_20 = arith.constant dense<0xFF800000> : vector<2x8xf32>
    %46 = vector.multi_reduction <maximumf>, %45, %cst_20 [2] : vector<2x8x9xf32> to vector<2x8xf32>
    %47 = vector.shape_cast %46 : vector<2x8xf32> to vector<2x8x1xf32>
    %48 = vector.broadcast %47 : vector<2x8x1xf32> to vector<2x8x9xf32>
    %49 = arith.subf %45, %48 : vector<2x8x9xf32>
    %50 = math.exp %49 : vector<2x8x9xf32>
    %cst_21 = arith.constant dense<0.000000e+00> : vector<2x8xf32>
    %51 = vector.multi_reduction <add>, %50, %cst_21 [2] : vector<2x8x9xf32> to vector<2x8xf32>
    %52 = vector.shape_cast %51 : vector<2x8xf32> to vector<2x8x1xf32>
    %cst_22 = arith.constant 4.000000e+00 : f32
    %53 = vector.broadcast %cst_22 : f32 to vector<2x8x1xf32>
    %54 = arith.mulf %52, %53 : vector<2x8x1xf32>
    %55 = tpu.reciprocal %54 {approx = true} : vector<2x8x1xf32> -> vector<2x8x1xf32>
    %56 = vector.broadcast %55 : vector<2x8x1xf32> to vector<2x8x9xf32>
    %57 = arith.mulf %50, %56 : vector<2x8x9xf32>
    %58 = arith.addf %40, %57 : vector<2x8x9xf32>
    %59 = vector.extract_strided_slice %0 {offsets = [0, 0, 24], sizes = [2, 8, 8], strides = [1, 1, 1]} : vector<2x8x32xbf16> to vector<2x8x8xbf16>
    %60 = vector.extract_strided_slice %1 {offsets = [0, 0, 24], sizes = [2, 9, 8], strides = [1, 1, 1]} : vector<2x9x32xbf16> to vector<2x9x8xbf16>
    "tpu.trace_start"() <{level = 10 : i32, message = "bqd,bkd->bqk"}> : () -> ()
    %cst_23 = arith.constant dense<0.000000e+00> : vector<2x8x9xf32>
    %61 = tpu.matmul %59, %60, %cst_23 {dimension_numbers = #tpu.dot_dimension_numbers<[2], [2], [1], [1], [0, 0, 0, 1, 1, 1], [0], [0]>} : vector<2x8x8xbf16>, vector<2x9x8xbf16>, vector<2x8x9xf32> -> vector<2x8x9xf32>
    "tpu.trace_stop"() : () -> ()
    %62 = vector.broadcast %3 : vector<2x1x9xf32> to vector<2x8x9xf32>
    %63 = arith.addf %61, %62 : vector<2x8x9xf32>
    %cst_24 = arith.constant dense<0xFF800000> : vector<2x8xf32>
    %64 = vector.multi_reduction <maximumf>, %63, %cst_24 [2] : vector<2x8x9xf32> to vector<2x8xf32>
    %65 = vector.shape_cast %64 : vector<2x8xf32> to vector<2x8x1xf32>
    %66 = vector.broadcast %65 : vector<2x8x1xf32> to vector<2x8x9xf32>
    %67 = arith.subf %63, %66 : vector<2x8x9xf32>
    %68 = math.exp %67 : vector<2x8x9xf32>
    %cst_25 = arith.constant dense<0.000000e+00> : vector<2x8xf32>
    %69 = vector.multi_reduction <add>, %68, %cst_25 [2] : vector<2x8x9xf32> to vector<2x8xf32>
    %70 = vector.shape_cast %69 : vector<2x8xf32> to vector<2x8x1xf32>
    %cst_26 = arith.constant 4.000000e+00 : f32
    %71 = vector.broadcast %cst_26 : f32 to vector<2x8x1xf32>
    %72 = arith.mulf %70, %71 : vector<2x8x1xf32>
    %73 = tpu.reciprocal %72 {approx = true} : vector<2x8x1xf32> -> vector<2x8x1xf32>
    %74 = vector.broadcast %73 : vector<2x8x1xf32> to vector<2x8x9xf32>
    %75 = arith.mulf %68, %74 : vector<2x8x9xf32>
    %76 = arith.addf %58, %75 : vector<2x8x9xf32>
    %77 = arith.truncf %76 : vector<2x8x9xf32> to vector<2x8x9xbf16>
    "tpu.trace_start"() <{level = 10 : i32, message = "bqk,bkd->bqd"}> : () -> ()
    %cst_27 = arith.constant dense<0.000000e+00> : vector<2x8x48xf32>
    %78 = tpu.matmul %77, %2, %cst_27 {dimension_numbers = #tpu.dot_dimension_numbers<[2], [1], [1], [2], [0, 0, 0, 1, 1, 2], [0], [0]>} : vector<2x8x9xbf16>, vector<2x9x48xbf16>, vector<2x8x48xf32> -> vector<2x8x48xf32>
    "tpu.trace_stop"() : () -> ()
    %79 = arith.truncf %78 : vector<2x8x48xf32> to vector<2x8x48xbf16>
    %c0_28 = arith.constant 0 : index
    %c0_29 = arith.constant 0 : index
    %c0_30 = arith.constant 0 : index
    %80 = vector.load %arg6[%c0_28, %c0_29, %c0_30] : memref<2x8x48xbf16, #tpu.memory_space<vmem>>, vector<2x8x48xbf16>
    tpu.vector_store %arg6[%c0_28, %c0_29, %c0_30], %79 {strides = array<i32>} : memref<2x8x48xbf16, #tpu.memory_space<vmem>>, vector<2x8x48xbf16>,
    return
  }
  func.func @transform_0(%arg0: i32, %arg1: i32) -> (i32, i32, i32) {
    %c0_i32 = arith.constant 0 : i32
    %c0_i32_0 = arith.constant 0 : i32
    return %arg0, %arg1, %c0_i32 : i32, i32, i32
  }
  func.func @transform_1(%arg0: i32, %arg1: i32) -> (i32, i32, i32) {
    %c0_i32 = arith.constant 0 : i32
    %c0_i32_0 = arith.constant 0 : i32
    %c0_i32_1 = arith.constant 0 : i32
    return %arg0, %c0_i32, %c0_i32_0 : i32, i32, i32
  }
  func.func @transform_2(%arg0: i32, %arg1: i32) -> (i32, i32, i32) {
    %c0_i32 = arith.constant 0 : i32
    %c0_i32_0 = arith.constant 0 : i32
    %c0_i32_1 = arith.constant 0 : i32
    return %arg0, %c0_i32, %c0_i32_0 : i32, i32, i32
  }
  func.func @transform_3(%arg0: i32, %arg1: i32) -> (i32, i32, i32) {
    %c0_i32 = arith.constant 0 : i32
    %c0_i32_0 = arith.constant 0 : i32
    %c0_i32_1 = arith.constant 0 : i32
    return %arg0, %c0_i32, %c0_i32_0 : i32, i32, i32
  }
  func.func @transform_4(%arg0: i32, %arg1: i32) -> (i32, i32, i32) {
    %c0_i32 = arith.constant 0 : i32
    %c0_i32_0 = arith.constant 0 : i32
    return %arg0, %arg1, %c0_i32 : i32, i32, i32
  }
}

module attributes {stable_mosaic.version = 11 : i64} {
  func.func @_ffn_kernel(%arg0: i32, %arg1: memref<16x32xf32, #tpu.memory_space<vmem>>, %arg2: memref<16x48xbf16, #tpu.memory_space<vmem>>, %arg3: memref<32x32xbf16, #tpu.memory_space<vmem>>, %arg4: memref<48x32xbf16, #tpu.memory_space<vmem>>, %arg5: memref<1x32xf32, #tpu.memory_space<vmem>>, %arg6: memref<16x32xf32, #tpu.memory_space<vmem>>) attributes {dimension_semantics = [#tpu.dimension_semantics<parallel>], iteration_bounds = array<i64: 1>, scalar_prefetch = 0 : i64, scratch_operands = 0 : i64, tpu.core_type = #tpu.core_type<tc>, window_params = [{transform_indices = @transform_0, window_bounds = array<i64: 16, 32>}, {transform_indices = @transform_1, window_bounds = array<i64: 16, 48>}, {pipeline_mode = #tpu.pipeline_mode<synchronous>, transform_indices = @transform_2, window_bounds = array<i64: 32, 32>}, {pipeline_mode = #tpu.pipeline_mode<synchronous>, transform_indices = @transform_3, window_bounds = array<i64: 48, 32>}, {pipeline_mode = #tpu.pipeline_mode<synchronous>, transform_indices = @transform_4, window_bounds = array<i64: 1, 32>}, {transform_indices = @transform_5, window_bounds = array<i64: 16, 32>}]} {
    %c0 = arith.constant 0 : index
    %c0_0 = arith.constant 0 : index
    %0 = vector.load %arg1[%c0, %c0_0] : memref<16x32xf32, #tpu.memory_space<vmem>>, vector<16x32xf32>
    %1 = arith.truncf %0 : vector<16x32xf32> to vector<16x32xbf16>
    %c0_1 = arith.constant 0 : index
    %c0_2 = arith.constant 0 : index
    %2 = vector.load %arg3[%c0_1, %c0_2] : memref<32x32xbf16, #tpu.memory_space<vmem>>, vector<32x32xbf16>
    %cst = arith.constant dense<0.000000e+00> : vector<16x32xf32>
    %3 = tpu.matmul %1, %2, %cst {dimension_numbers = #tpu.dot_dimension_numbers<[1], [0], [0], [1], [0, 0, 1, 1], [], []>} : vector<16x32xbf16>, vector<32x32xbf16>, vector<16x32xf32> -> vector<16x32xf32>
    %c0_3 = arith.constant 0 : index
    %c0_4 = arith.constant 0 : index
    %4 = vector.load %arg2[%c0_3, %c0_4] : memref<16x48xbf16, #tpu.memory_space<vmem>>, vector<16x48xbf16>
    %c0_5 = arith.constant 0 : index
    %c0_6 = arith.constant 0 : index
    %5 = vector.load %arg4[%c0_5, %c0_6] : memref<48x32xbf16, #tpu.memory_space<vmem>>, vector<48x32xbf16>
    %cst_7 = arith.constant dense<0.000000e+00> : vector<16x32xf32>
    %6 = tpu.matmul %4, %5, %cst_7 {dimension_numbers = #tpu.dot_dimension_numbers<[1], [0], [0], [1], [0, 0, 1, 1], [], []>} : vector<16x48xbf16>, vector<48x32xbf16>, vector<16x32xf32> -> vector<16x32xf32>
    %7 = arith.addf %3, %6 : vector<16x32xf32>
    %c0_8 = arith.constant 0 : index
    %c0_9 = arith.constant 0 : index
    %8 = vector.load %arg5[%c0_8, %c0_9] : memref<1x32xf32, #tpu.memory_space<vmem>>, vector<1x32xf32>
    %9 = vector.broadcast %8 : vector<1x32xf32> to vector<16x32xf32>
    %10 = arith.addf %7, %9 : vector<16x32xf32>
    %cst_10 = arith.constant 0.000000e+00 : f32
    %11 = vector.broadcast %cst_10 : f32 to vector<16x32xf32>
    %12 = arith.maximumf %10, %11 : vector<16x32xf32>
    %13 = arith.addf %0, %12 : vector<16x32xf32>
    %c0_11 = arith.constant 0 : index
    %c0_12 = arith.constant 0 : index
    %14 = vector.load %arg6[%c0_11, %c0_12] : memref<16x32xf32, #tpu.memory_space<vmem>>, vector<16x32xf32>
    tpu.vector_store %arg6[%c0_11, %c0_12], %13 {strides = array<i32>} : memref<16x32xf32, #tpu.memory_space<vmem>>, vector<16x32xf32>,
    return
  }
  func.func @transform_0(%arg0: i32) -> (i32, i32) {
    %c0_i32 = arith.constant 0 : i32
    %c0_i32_0 = arith.constant 0 : i32
    return %arg0, %c0_i32 : i32, i32
  }
  func.func @transform_1(%arg0: i32) -> (i32, i32) {
    %c0_i32 = arith.constant 0 : i32
    %c0_i32_0 = arith.constant 0 : i32
    return %arg0, %c0_i32 : i32, i32
  }
  func.func @transform_2(%arg0: i32) -> (i32, i32) {
    %c0_i32 = arith.constant 0 : i32
    %c0_i32_0 = arith.constant 0 : i32
    %c0_i32_1 = arith.constant 0 : i32
    return %c0_i32, %c0_i32_0 : i32, i32
  }
  func.func @transform_3(%arg0: i32) -> (i32, i32) {
    %c0_i32 = arith.constant 0 : i32
    %c0_i32_0 = arith.constant 0 : i32
    %c0_i32_1 = arith.constant 0 : i32
    return %c0_i32, %c0_i32_0 : i32, i32
  }
  func.func @transform_4(%arg0: i32) -> (i32, i32) {
    %c0_i32 = arith.constant 0 : i32
    %c0_i32_0 = arith.constant 0 : i32
    %c0_i32_1 = arith.constant 0 : i32
    return %c0_i32, %c0_i32_0 : i32, i32
  }
  func.func @transform_5(%arg0: i32) -> (i32, i32) {
    %c0_i32 = arith.constant 0 : i32
    %c0_i32_0 = arith.constant 0 : i32
    return %arg0, %c0_i32 : i32, i32
  }
}

</mosaic_0001>

<llo_original>
// kernel: normal_sublayer_forward.7
$region0: #{normal_sublayer_forward.7}
  #allocation0 [shape = 'u32[]', space=smem, size = 0x4, offset = 0x4, fixed_abs, tag = 'smem constant byte address 0x4 - core index']
  #allocation1 [shape = 'u32[144,128]{1,0:T(1,128)}', space=vmem, size = 0x12000, scoped, tag = 'internal scratch']
  %s0 = inlined_call_operand.vmem [shape: bf16[18,48], index: 0, kind: input, shape index: {}]
  %s1 = inlined_call_operand.vmem [shape: bf16[48,32], index: 1, kind: input, shape index: {}]
  %s2 = inlined_call_operand.vmem [shape: bf16[18,32], index: 2, kind: output, shape index: {}]
  %s3 = sld [smem:[#allocation0]]
  $region18: #{normal_sublayer_forward.7} parent=0
    _
  %s5 = ssub.s32 1, %s3
  %s6 = scalar_select 0, %s5, %s3
  // Predicated region
  $region2: #{normal_sublayer_forward.7} parent=0 // pred_check
    _
  $region3: #{normal_sublayer_forward.7} parent=0 // pred_check_branch
    %8 = sbr.rel (0) target = $region5
  $region4: #{normal_sublayer_forward.7} parent=0 // pred_region
    _
  $region5: #{normal_sublayer_forward.7} parent=0 // pred_fallthru
    _
  // Predicated region
  $region6: #{normal_sublayer_forward.7} parent=0 // pred_check
    _
  $region7: #{normal_sublayer_forward.7} parent=0 // pred_check_branch
    %10 = sbr.rel (0) target = $region9
  $region8: #{normal_sublayer_forward.7} parent=0 // pred_region
    _
  $region9: #{normal_sublayer_forward.7} parent=0 // pred_fallthru
    _
  %v12 = vld [vmem:[%s0] sm:$0xf]
  %v13 = vld [vmem:[%s0 + $0x4] sm:$0xf]
  %v14 = vld [vmem:[%s0 + $0x8] sm:$0x1]
  %v15 = vld [vmem:[%s1] sm:$0xf]
  %v16 = vld [vmem:[%s1 + $0x4] sm:$0xf]
  %v17 = vld [vmem:[%s1 + $0x8] sm:$0xf]
  %v18 = vld [vmem:[%s1 + $0xc] sm:$0xf]
  %v19 = vld [vmem:[%s1 + $0x10] sm:$0xf]
  %v20 = vld [vmem:[%s1 + $0x14] sm:$0xf]
  %v24 = vunpack.c.l.b16 %v12
  %v25 = vunpack.c.l.b16 %v13
  %v26 = vunpack.c.l.b16 %v14
  %v27 = vpack.c.b16 %v25, %v24
  %v28 = vpack.c.b16 %v26, %v26
  %v35 = vunpack.c.l.b16 %v15
  %v36 = vunpack.c.l.b16 %v16
  %v37 = vunpack.c.l.b16 %v17
  %v38 = vunpack.c.l.b16 %v18
  %v39 = vunpack.c.l.b16 %v19
  %v40 = vunpack.c.l.b16 %v20
  %v41 = vpack.c.b16 %v36, %v35
  %v42 = vpack.c.b16 %v38, %v37
  %v43 = vpack.c.b16 %v40, %v39
  %vm47 = vcmask 392192
  %v49 = vsel %vm47, %v27, 0
  %v52 = vsel %vm47, %v28, 0
  %54 = vmatprep.subr.bf16.mxu0 0
  %55 = vmatpush1.bf16.msra.mxu0 %v41
  %56 = vmatprep.subr.bf16.mxu0 0
  %57 = vmatpush1.bf16.msra.mxu0 %v42
  %58 = vmatprep.subr.bf16.mxu0 0
  %59 = vmatpush1.bf16.msra.mxu0 %v43
  %60 = vmatprep.subr.bf16.mxu0 0
  %61 = vmatpush1.bf16.msra.mxu0 0
  %62 = vmatprep.subr.bf16.mxu0 0
  %63 = vmatpush1.bf16.msra.mxu0 0
  %64 = vmatprep.subr.bf16.mxu0 0
  %65 = vmatpush1.bf16.msra.mxu0 0
  %66 = vmatprep.subr.bf16.mxu0 0
  %67 = vmatpush1.bf16.msra.mxu0 0
  %68 = vmatprep.subr.bf16.mxu0 0
  %69 = vmatpush1.bf16.msra.mxu0 0
  %70 = vmatprep.subr.bf16.mxu0 0
  %71 = vmatpush1.bf16.msra.mxu0 0
  %72 = vmatprep.subr.bf16.mxu0 0
  %73 = vmatpush1.bf16.msra.mxu0 0
  %74 = vmatprep.subr.bf16.mxu0 0
  %75 = vmatpush1.bf16.msra.mxu0 0
  %76 = vmatprep.subr.bf16.mxu0 0
  %77 = vmatpush1.bf16.msra.mxu0 0
  %78 = vmatprep.subr.bf16.mxu0 0
  %79 = vmatpush1.bf16.msra.mxu0 0
  %80 = vmatprep.subr.bf16.mxu0 0
  %81 = vmatpush1.bf16.msra.mxu0 0
  %82 = vmatprep.subr.bf16.mxu0 0
  %83 = vmatpush1.bf16.msra.mxu0 0
  %84 = vmatprep.subr.bf16.mxu0 0
  %85 = vmatpush1.bf16.msra.mxu0 0
  %86 = vmatprep.mubr.bf16.mxu0 0
  %87 = vmatmul.mubr.bf16.gmra.mrb[0].mxu0 %v49
  %v88 = vpop.f32.mrb[0].mxu0
  %v89 = vadd.f32 0.0, %v88
  %v90 = vpop.f32.mrb[0].mxu0
  %v91 = vpop.f32.mrb[0].mxu0
  %v92 = vadd.f32 0.0, %v91
  %v93 = vpop.f32.mrb[0].mxu0
  %94 = vmatprep.mubr.bf16.mxu0 0
  %95 = vmatmul.mubr.bf16.gmra.mrb[0].mxu0 %v52
  %v96 = vpop.f32.mrb[0].mxu0
  %v97 = vadd.f32 0.0, %v96
  %v98 = vpop.f32.mrb[0].mxu0
  %v99 = vpop.f32.mrb[0].mxu0
  %v100 = vpop.f32.mrb[0].mxu0
  %101 = vdwg.mxu0
  %v102 = vpack.c.bf16 %v92, %v89
  %v103 = vpack.c.bf16 %v97, %v97
  %v106 = vunpack.c.l.b16 %v102
  %v107 = vunpack.c.h.b16 %v102
  %v108 = vunpack.c.l.b16 %v103
  %v109 = vpack.c.b16 %v106, %v106
  %v110 = vpack.c.b16 %v107, %v107
  %v111 = vpack.c.b16 %v108, %v108
  %vm115 = vcmask 257024
  %116 = vst.msk [vmem:[%s2] sm:$0xf] %vm115, %v109
  %117 = vst.msk [vmem:[%s2 + $0x4] sm:$0xf] %vm115, %v110
  %vm118 = vcmask 253952
  %119 = vst.msk [vmem:[%s2 + $0x8] sm:$0x1] %vm118, %v111
  // Predicated region
  $region10: #{normal_sublayer_forward.7} parent=0 // pred_check
    _
  $region11: #{normal_sublayer_forward.7} parent=0 // pred_check_branch
    %121 = sbr.rel (0) target = $region13
  $region12: #{normal_sublayer_forward.7} parent=0 // pred_region
    _
  $region13: #{normal_sublayer_forward.7} parent=0 // pred_fallthru
    _
  // Predicated region
  $region14: #{normal_sublayer_forward.7} parent=0 // pred_check
    _
  $region15: #{normal_sublayer_forward.7} parent=0 // pred_check_branch
    %123 = sbr.rel (0) target = $region17
  $region16: #{normal_sublayer_forward.7} parent=0 // pred_region
    _
  $region17: #{normal_sublayer_forward.7} parent=0 // pred_fallthru
    _

// kernel: normal_sublayer_forward.6
$region0: #{normal_sublayer_forward.6}
  #allocation0 [shape = 'u32[]', space=smem, size = 0x4, offset = 0x4, fixed_abs, tag = 'smem constant byte address 0x4 - core index']
  #allocation1 [shape = 'u32[144,128]{1,0:T(1,128)}', space=vmem, size = 0x12000, scoped, tag = 'internal scratch']
  %s0 = inlined_call_operand.vmem [shape: bf16[22,32], index: 0, kind: input, shape index: {}]
  %s1 = inlined_call_operand.vmem [shape: bf16[32,32], index: 1, kind: input, shape index: {}]
  %s2 = inlined_call_operand.vmem [shape: bf16[22,32], index: 2, kind: output, shape index: {}]
  %s3 = sld [smem:[#allocation0]]
  $region18: #{normal_sublayer_forward.6} parent=0
    _
  %s5 = ssub.s32 1, %s3
  %s6 = scalar_select 0, %s5, %s3
  // Predicated region
  $region2: #{normal_sublayer_forward.6} parent=0 // pred_check
    _
  $region3: #{normal_sublayer_forward.6} parent=0 // pred_check_branch
    %8 = sbr.rel (0) target = $region5
  $region4: #{normal_sublayer_forward.6} parent=0 // pred_region
    _
  $region5: #{normal_sublayer_forward.6} parent=0 // pred_fallthru
    _
  // Predicated region
  $region6: #{normal_sublayer_forward.6} parent=0 // pred_check
    _
  $region7: #{normal_sublayer_forward.6} parent=0 // pred_check_branch
    %10 = sbr.rel (0) target = $region9
  $region8: #{normal_sublayer_forward.6} parent=0 // pred_region
    _
  $region9: #{normal_sublayer_forward.6} parent=0 // pred_fallthru
    _
  %v12 = vld [vmem:[%s0] sm:$0xf]
  %v13 = vld [vmem:[%s0 + $0x4] sm:$0xf]
  %v14 = vld [vmem:[%s0 + $0x8] sm:$0x7]
  %v15 = vld [vmem:[%s1] sm:$0xf]
  %v16 = vld [vmem:[%s1 + $0x4] sm:$0xf]
  %v17 = vld [vmem:[%s1 + $0x8] sm:$0xf]
  %v18 = vld [vmem:[%s1 + $0xc] sm:$0xf]
  %v22 = vunpack.c.l.b16 %v12
  %v23 = vunpack.c.l.b16 %v13
  %v24 = vunpack.c.l.b16 %v14
  %v25 = vpack.c.b16 %v23, %v22
  %v26 = vpack.c.b16 %v24, %v24
  %v31 = vunpack.c.l.b16 %v15
  %v32 = vunpack.c.l.b16 %v16
  %v33 = vunpack.c.l.b16 %v17
  %v34 = vunpack.c.l.b16 %v18
  %v35 = vpack.c.b16 %v32, %v31
  %v36 = vpack.c.b16 %v34, %v33
  %vm39 = vcmask 261120
  %v41 = vsel %vm39, %v25, 0
  %v44 = vsel %vm39, %v26, 0
  %46 = vmatprep.subr.bf16.mxu0 0
  %47 = vmatpush1.bf16.msra.mxu0 %v35
  %48 = vmatprep.subr.bf16.mxu0 0
  %49 = vmatpush1.bf16.msra.mxu0 %v36
  %50 = vmatprep.subr.bf16.mxu0 0
  %51 = vmatpush1.bf16.msra.mxu0 0
  %52 = vmatprep.subr.bf16.mxu0 0
  %53 = vmatpush1.bf16.msra.mxu0 0
  %54 = vmatprep.subr.bf16.mxu0 0
  %55 = vmatpush1.bf16.msra.mxu0 0
  %56 = vmatprep.subr.bf16.mxu0 0
  %57 = vmatpush1.bf16.msra.mxu0 0
  %58 = vmatprep.subr.bf16.mxu0 0
  %59 = vmatpush1.bf16.msra.mxu0 0
  %60 = vmatprep.subr.bf16.mxu0 0
  %61 = vmatpush1.bf16.msra.mxu0 0
  %62 = vmatprep.subr.bf16.mxu0 0
  %63 = vmatpush1.bf16.msra.mxu0 0
  %64 = vmatprep.subr.bf16.mxu0 0
  %65 = vmatpush1.bf16.msra.mxu0 0
  %66 = vmatprep.subr.bf16.mxu0 0
  %67 = vmatpush1.bf16.msra.mxu0 0
  %68 = vmatprep.subr.bf16.mxu0 0
  %69 = vmatpush1.bf16.msra.mxu0 0
  %70 = vmatprep.subr.bf16.mxu0 0
  %71 = vmatpush1.bf16.msra.mxu0 0
  %72 = vmatprep.subr.bf16.mxu0 0
  %73 = vmatpush1.bf16.msra.mxu0 0
  %74 = vmatprep.subr.bf16.mxu0 0
  %75 = vmatpush1.bf16.msra.mxu0 0
  %76 = vmatprep.subr.bf16.mxu0 0
  %77 = vmatpush1.bf16.msra.mxu0 0
  %78 = vmatprep.mubr.bf16.mxu0 0
  %79 = vmatmul.mubr.bf16.gmra.mrb[0].mxu0 %v41
  %v80 = vpop.f32.mrb[0].mxu0
  %v81 = vadd.f32 0.0, %v80
  %v82 = vpop.f32.mrb[0].mxu0
  %v83 = vpop.f32.mrb[0].mxu0
  %v84 = vadd.f32 0.0, %v83
  %v85 = vpop.f32.mrb[0].mxu0
  %86 = vmatprep.mubr.bf16.mxu0 0
  %87 = vmatmul.mubr.bf16.gmra.mrb[0].mxu0 %v44
  %v88 = vpop.f32.mrb[0].mxu0
  %v89 = vadd.f32 0.0, %v88
  %v90 = vpop.f32.mrb[0].mxu0
  %v91 = vpop.f32.mrb[0].mxu0
  %v92 = vpop.f32.mrb[0].mxu0
  %93 = vdwg.mxu0
  %v94 = vpack.c.bf16 %v84, %v81
  %v95 = vpack.c.bf16 %v89, %v89
  %v98 = vunpack.c.l.b16 %v94
  %v99 = vunpack.c.h.b16 %v94
  %v100 = vunpack.c.l.b16 %v95
  %v101 = vpack.c.b16 %v98, %v98
  %v102 = vpack.c.b16 %v99, %v99
  %v103 = vpack.c.b16 %v100, %v100
  %vm107 = vcmask 257024
  %108 = vst.msk [vmem:[%s2] sm:$0xf] %vm107, %v101
  %109 = vst.msk [vmem:[%s2 + $0x4] sm:$0xf] %vm107, %v102
  %vm110 = vcmask 256000
  %111 = vst.msk [vmem:[%s2 + $0x8] sm:$0x7] %vm110, %v103
  // Predicated region
  $region10: #{normal_sublayer_forward.6} parent=0 // pred_check
    _
  $region11: #{normal_sublayer_forward.6} parent=0 // pred_check_branch
    %113 = sbr.rel (0) target = $region13
  $region12: #{normal_sublayer_forward.6} parent=0 // pred_region
    _
  $region13: #{normal_sublayer_forward.6} parent=0 // pred_fallthru
    _
  // Predicated region
  $region14: #{normal_sublayer_forward.6} parent=0 // pred_check
    _
  $region15: #{normal_sublayer_forward.6} parent=0 // pred_check_branch
    %115 = sbr.rel (0) target = $region17
  $region16: #{normal_sublayer_forward.6} parent=0 // pred_region
    _
  $region17: #{normal_sublayer_forward.6} parent=0 // pred_fallthru
    _

// kernel: normal_sublayer_forward.11
$region0: #{normal_sublayer_forward.11}
  #allocation0 [shape = 'u32[]', space=smem, size = 0x4, offset = 0x4, fixed_abs, tag = 'smem constant byte address 0x4 - core index']
  #allocation1 [shape = 'u32[144,128]{1,0:T(1,128)}', space=vmem, size = 0x12000, scoped, tag = 'internal scratch']
  %s0 = inlined_call_operand.vmem [shape: f32[12,48], index: 0, kind: input, shape index: {}]
  %s1 = inlined_call_operand.vmem [shape: bf16[12,32], index: 1, kind: input, shape index: {}]
  %s2 = inlined_call_operand.vmem [shape: bf16[48,48], index: 2, kind: input, shape index: {}]
  %s3 = inlined_call_operand.vmem [shape: bf16[32,48], index: 3, kind: input, shape index: {}]
  %s4 = inlined_call_operand.vmem [shape: f32[1,48], index: 4, kind: input, shape index: {}]
  %s5 = inlined_call_operand.vmem [shape: f32[12,48], index: 5, kind: output, shape index: {}]
  %s6 = sld [smem:[#allocation0]]
  $region30: #{normal_sublayer_forward.11} parent=0
    _
  %s8 = ssub.s32 1, %s6
  %s9 = scalar_select 0, %s8, %s6
  // Predicated region
  $region2: #{normal_sublayer_forward.11} parent=0 // pred_check
    _
  $region3: #{normal_sublayer_forward.11} parent=0 // pred_check_branch
    %11 = sbr.rel (0) target = $region5
  $region4: #{normal_sublayer_forward.11} parent=0 // pred_region
    _
  $region5: #{normal_sublayer_forward.11} parent=0 // pred_fallthru
    _
  // Predicated region
  $region6: #{normal_sublayer_forward.11} parent=0 // pred_check
    _
  $region7: #{normal_sublayer_forward.11} parent=0 // pred_check_branch
    %13 = sbr.rel (0) target = $region9
  $region8: #{normal_sublayer_forward.11} parent=0 // pred_region
    _
  $region9: #{normal_sublayer_forward.11} parent=0 // pred_fallthru
    _
  // Predicated region
  $region10: #{normal_sublayer_forward.11} parent=0 // pred_check
    _
  $region11: #{normal_sublayer_forward.11} parent=0 // pred_check_branch
    %15 = sbr.rel (0) target = $region13
  $region12: #{normal_sublayer_forward.11} parent=0 // pred_region
    _
  $region13: #{normal_sublayer_forward.11} parent=0 // pred_fallthru
    _
  // Predicated region
  $region14: #{normal_sublayer_forward.11} parent=0 // pred_check
    _
  $region15: #{normal_sublayer_forward.11} parent=0 // pred_check_branch
    %17 = sbr.rel (0) target = $region17
  $region16: #{normal_sublayer_forward.11} parent=0 // pred_region
    _
  $region17: #{normal_sublayer_forward.11} parent=0 // pred_fallthru
    _
  // Predicated region
  $region18: #{normal_sublayer_forward.11} parent=0 // pred_check
    _
  $region19: #{normal_sublayer_forward.11} parent=0 // pred_check_branch
    %19 = sbr.rel (0) target = $region21
  $region20: #{normal_sublayer_forward.11} parent=0 // pred_region
    _
  $region21: #{normal_sublayer_forward.11} parent=0 // pred_fallthru
    _
  %v21 = vld [vmem:[%s0] sm:$0xff]
  %v22 = vld [vmem:[%s0 + $0x8] sm:$0xf]
  %v23 = vpack.c.bf16 %v22, %v21
  %v24 = vld [vmem:[%s2] sm:$0xf]
  %v25 = vld [vmem:[%s2 + $0x4] sm:$0xf]
  %v26 = vld [vmem:[%s2 + $0x8] sm:$0xf]
  %v27 = vld [vmem:[%s2 + $0xc] sm:$0xf]
  %v28 = vld [vmem:[%s2 + $0x10] sm:$0xf]
  %v29 = vld [vmem:[%s2 + $0x14] sm:$0xf]
  %v30 = vld [vmem:[%s1] sm:$0xf]
  %v31 = vld [vmem:[%s1 + $0x4] sm:$0x3]
  %v32 = vld [vmem:[%s3] sm:$0xf]
  %v33 = vld [vmem:[%s3 + $0x4] sm:$0xf]
  %v34 = vld [vmem:[%s3 + $0x8] sm:$0xf]
  %v35 = vld [vmem:[%s3 + $0xc] sm:$0xf]
  %v38 = vunpack.c.l.b16 %v30
  %v39 = vunpack.c.l.b16 %v31
  %v40 = vpack.c.b16 %v39, %v38
  %v45 = vunpack.c.l.b16 %v32
  %v46 = vunpack.c.l.b16 %v33
  %v47 = vunpack.c.l.b16 %v34
  %v48 = vunpack.c.l.b16 %v35
  %v49 = vpack.c.b16 %v46, %v45
  %v50 = vpack.c.b16 %v48, %v47
  %vm53 = vcmask 261120
  %v55 = vsel %vm53, %v40, 0
  %57 = vmatprep.subr.bf16.mxu0 0
  %58 = vmatpush1.bf16.msra.mxu0 %v49
  %59 = vmatprep.subr.bf16.mxu0 0
  %60 = vmatpush1.bf16.msra.mxu0 %v50
  %61 = vmatprep.subr.bf16.mxu0 0
  %62 = vmatpush1.bf16.msra.mxu0 0
  %63 = vmatprep.subr.bf16.mxu0 0
  %64 = vmatpush1.bf16.msra.mxu0 0
  %65 = vmatprep.subr.bf16.mxu0 0
  %66 = vmatpush1.bf16.msra.mxu0 0
  %67 = vmatprep.subr.bf16.mxu0 0
  %68 = vmatpush1.bf16.msra.mxu0 0
  %69 = vmatprep.subr.bf16.mxu0 0
  %70 = vmatpush1.bf16.msra.mxu0 0
  %71 = vmatprep.subr.bf16.mxu0 0
  %72 = vmatpush1.bf16.msra.mxu0 0
  %73 = vmatprep.subr.bf16.mxu0 0
  %74 = vmatpush1.bf16.msra.mxu0 0
  %75 = vmatprep.subr.bf16.mxu0 0
  %76 = vmatpush1.bf16.msra.mxu0 0
  %77 = vmatprep.subr.bf16.mxu0 0
  %78 = vmatpush1.bf16.msra.mxu0 0
  %79 = vmatprep.subr.bf16.mxu0 0
  %80 = vmatpush1.bf16.msra.mxu0 0
  %81 = vmatprep.subr.bf16.mxu0 0
  %82 = vmatpush1.bf16.msra.mxu0 0
  %83 = vmatprep.subr.bf16.mxu0 0
  %84 = vmatpush1.bf16.msra.mxu0 0
  %85 = vmatprep.subr.bf16.mxu0 0
  %86 = vmatpush1.bf16.msra.mxu0 0
  %87 = vmatprep.subr.bf16.mxu0 0
  %88 = vmatpush1.bf16.msra.mxu0 0
  %89 = vmatprep.mubr.bf16.mxu0 0
  %90 = vmatmul.mubr.bf16.gmra.mrb[0].mxu0 %v55
  %v91 = vpop.f32.mrb[0].mxu0
  %v92 = vadd.f32 0.0, %v91
  %v93 = vpop.f32.mrb[0].mxu0
  %v94 = vpop.f32.mrb[0].mxu0
  %v95 = vadd.f32 0.0, %v94
  %v96 = vpop.f32.mrb[0].mxu0
  %97 = vdwg.mxu0
  %v104 = vunpack.c.l.b16 %v24
  %v105 = vunpack.c.l.b16 %v25
  %v106 = vunpack.c.l.b16 %v26
  %v107 = vunpack.c.l.b16 %v27
  %v108 = vunpack.c.l.b16 %v28
  %v109 = vunpack.c.l.b16 %v29
  %v110 = vpack.c.b16 %v105, %v104
  %v111 = vpack.c.b16 %v107, %v106
  %v112 = vpack.c.b16 %v109, %v108
  %vm116 = vcmask 392192
  %v118 = vsel %vm116, %v23, 0
  %120 = vmatprep.subr.bf16.mxu0 0
  %121 = vmatpush1.bf16.msra.mxu0 %v110
  %122 = vmatprep.subr.bf16.mxu0 0
  %123 = vmatpush1.bf16.msra.mxu0 %v111
  %124 = vmatprep.subr.bf16.mxu0 0
  %125 = vmatpush1.bf16.msra.mxu0 %v112
  %126 = vmatprep.subr.bf16.mxu0 0
  %127 = vmatpush1.bf16.msra.mxu0 0
  %128 = vmatprep.subr.bf16.mxu0 0
  %129 = vmatpush1.bf16.msra.mxu0 0
  %130 = vmatprep.subr.bf16.mxu0 0
  %131 = vmatpush1.bf16.msra.mxu0 0
  %132 = vmatprep.subr.bf16.mxu0 0
  %133 = vmatpush1.bf16.msra.mxu0 0
  %134 = vmatprep.subr.bf16.mxu0 0
  %135 = vmatpush1.bf16.msra.mxu0 0
  %136 = vmatprep.subr.bf16.mxu0 0
  %137 = vmatpush1.bf16.msra.mxu0 0
  %138 = vmatprep.subr.bf16.mxu0 0
  %139 = vmatpush1.bf16.msra.mxu0 0
  %140 = vmatprep.subr.bf16.mxu0 0
  %141 = vmatpush1.bf16.msra.mxu0 0
  %142 = vmatprep.subr.bf16.mxu0 0
  %143 = vmatpush1.bf16.msra.mxu0 0
  %144 = vmatprep.subr.bf16.mxu0 0
  %145 = vmatpush1.bf16.msra.mxu0 0
  %146 = vmatprep.subr.bf16.mxu0 0
  %147 = vmatpush1.bf16.msra.mxu0 0
  %148 = vmatprep.subr.bf16.mxu0 0
  %149 = vmatpush1.bf16.msra.mxu0 0
  %150 = vmatprep.subr.bf16.mxu0 0
  %151 = vmatpush1.bf16.msra.mxu0 0
  %152 = vmatprep.mubr.bf16.mxu0 0
  %153 = vmatmul.mubr.bf16.gmra.mrb[0].mxu0 %v118
  %v154 = vpop.f32.mrb[0].mxu0
  %v155 = vadd.f32 %v92, %v154
  %v156 = vpop.f32.mrb[0].mxu0
  %v157 = vpop.f32.mrb[0].mxu0
  %v158 = vadd.f32 %v95, %v157
  %v159 = vpop.f32.mrb[0].mxu0
  %160 = vdwg.mxu0
  %v161 = vld [vmem:[%s4] sm:$0x1]
  %v163 = vlaneseq
  %v164 = vshrl.u32 %v163, 7
  %v165 = vsub.s32 0, %v164
  %v166 = vrot.slane %v161, %v165
  %v168 = vadd.f32 %v155, %v166
  %v169 = vadd.f32 %v158, %v166
  %v170 = vmax.f32 %v168, 0.0
  %v171 = vmax.f32 %v169, 0.0
  %v172 = vadd.f32 %v21, %v170
  %v173 = vadd.f32 %v22, %v171
  %174 = vst.msk [vmem:[%s5] sm:$0xff] %vm116, %v172
  %vm175 = vcmask 388096
  %176 = vst.msk [vmem:[%s5 + $0x8] sm:$0xf] %vm175, %v173
  // Predicated region
  $region22: #{normal_sublayer_forward.11} parent=0 // pred_check
    _
  $region23: #{normal_sublayer_forward.11} parent=0 // pred_check_branch
    %178 = sbr.rel (0) target = $region25
  $region24: #{normal_sublayer_forward.11} parent=0 // pred_region
    _
  $region25: #{normal_sublayer_forward.11} parent=0 // pred_fallthru
    _
  // Predicated region
  $region26: #{normal_sublayer_forward.11} parent=0 // pred_check
    _
  $region27: #{normal_sublayer_forward.11} parent=0 // pred_check_branch
    %180 = sbr.rel (0) target = $region29
  $region28: #{normal_sublayer_forward.11} parent=0 // pred_region
    _
  $region29: #{normal_sublayer_forward.11} parent=0 // pred_fallthru
    _

// kernel: normal_sublayer_forward.8
$region0: #{normal_sublayer_forward.8}
  #allocation0 [shape = 'u32[]', space=smem, size = 0x4, offset = 0x4, fixed_abs, tag = 'smem constant byte address 0x4 - core index']
  #allocation1 [shape = 'u32[144,128]{1,0:T(1,128)}', space=vmem, size = 0x12000, scoped, tag = 'internal scratch']
  %s0 = inlined_call_operand.vmem [shape: bf16[2,6,32], index: 0, kind: input, shape index: {}]
  %s1 = inlined_call_operand.vmem [shape: bf16[2,11,32], index: 1, kind: input, shape index: {}]
  %s2 = inlined_call_operand.vmem [shape: bf16[2,11,32], index: 2, kind: input, shape index: {}]
  %s3 = inlined_call_operand.vmem [shape: f32[2,1,11], index: 3, kind: input, shape index: {}]
  %s4 = inlined_call_operand.vmem [shape: bf16[2,6,32], index: 4, kind: output, shape index: {}]
  %s5 = sld [smem:[#allocation0]]
  $region26: #{normal_sublayer_forward.8} parent=0
    _
  %s7 = ssub.s32 1, %s5
  %s8 = scalar_select 0, %s7, %s5
  // Predicated region
  $region2: #{normal_sublayer_forward.8} parent=0 // pred_check
    _
  $region3: #{normal_sublayer_forward.8} parent=0 // pred_check_branch
    %10 = sbr.rel (0) target = $region5
  $region4: #{normal_sublayer_forward.8} parent=0 // pred_region
    _
  $region5: #{normal_sublayer_forward.8} parent=0 // pred_fallthru
    _
  // Predicated region
  $region6: #{normal_sublayer_forward.8} parent=0 // pred_check
    _
  $region7: #{normal_sublayer_forward.8} parent=0 // pred_check_branch
    %12 = sbr.rel (0) target = $region9
  $region8: #{normal_sublayer_forward.8} parent=0 // pred_region
    _
  $region9: #{normal_sublayer_forward.8} parent=0 // pred_fallthru
    _
  // Predicated region
  $region10: #{normal_sublayer_forward.8} parent=0 // pred_check
    _
  $region11: #{normal_sublayer_forward.8} parent=0 // pred_check_branch
    %14 = sbr.rel (0) target = $region13
  $region12: #{normal_sublayer_forward.8} parent=0 // pred_region
    _
  $region13: #{normal_sublayer_forward.8} parent=0 // pred_fallthru
    _
  // Predicated region
  $region14: #{normal_sublayer_forward.8} parent=0 // pred_check
    _
  $region15: #{normal_sublayer_forward.8} parent=0 // pred_check_branch
    %16 = sbr.rel (0) target = $region17
  $region16: #{normal_sublayer_forward.8} parent=0 // pred_region
    _
  $region17: #{normal_sublayer_forward.8} parent=0 // pred_fallthru
    _
  %v18 = vld [vmem:[%s0] sm:$0x7]
  %v19 = vld [vmem:[%s0 + $0x4] sm:$0x7]
  %v20 = vld [vmem:[%s1] sm:$0xf]
  %v21 = vld [vmem:[%s1 + $0x4] sm:$0x3]
  %v22 = vld [vmem:[%s1 + $0x8] sm:$0xf]
  %v23 = vld [vmem:[%s1 + $0xc] sm:$0x3]
  %v24 = vld [vmem:[%s2] sm:$0xf]
  %v25 = vld [vmem:[%s2 + $0x4] sm:$0x3]
  %v26 = vld [vmem:[%s2 + $0x8] sm:$0xf]
  %v27 = vld [vmem:[%s2 + $0xc] sm:$0x3]
  %v28 = vld [vmem:[%s3] sm:$0x1]
  %v29 = vld [vmem:[%s3 + $0x1] sm:$0x1]
  %v32 = vlaneseq
  %v33 = vshrl.u32 %v32, 7
  %v34 = vsub.s32 0, %v33
  %v35 = vrot.slane %v28, %v34
  %v36 = vlaneseq
  %v37 = vshrl.u32 %v36, 7
  %v38 = vsub.s32 0, %v37
  %v39 = vrot.slane %v29, %v38
  %v44 = vunpack.c.l.b16 %v20
  %v45 = vunpack.c.l.b16 %v21
  %v46 = vpack.c.b16 %v45, %v44
  %vm47 = vcmask 64512
  %v49 = vsel %vm47, %v18, 0
  %v52 = vsel %vm47, %v46, 0
  %54 = vmatprep.subr.bf16.mxu0 0
  %55 = vmatpush1.bf16.xpose.msra.mxu0 %v52
  %56 = vmatprep.subr.bf16.mxu0 0
  %57 = vmatpush1.bf16.xpose.msra.mxu0 0
  %58 = vmatprep.subr.bf16.mxu0 0
  %59 = vmatpush1.bf16.xpose.msra.mxu0 0
  %60 = vmatprep.subr.bf16.mxu0 0
  %61 = vmatpush1.bf16.xpose.msra.mxu0 0
  %62 = vmatprep.subr.bf16.mxu0 0
  %63 = vmatpush1.bf16.xpose.msra.mxu0 0
  %64 = vmatprep.subr.bf16.mxu0 0
  %65 = vmatpush1.bf16.xpose.msra.mxu0 0
  %66 = vmatprep.subr.bf16.mxu0 0
  %67 = vmatpush1.bf16.xpose.msra.mxu0 0
  %68 = vmatprep.subr.bf16.mxu0 0
  %69 = vmatpush1.bf16.xpose.msra.mxu0 0
  %70 = vmatprep.subr.bf16.mxu0 0
  %71 = vmatpush1.bf16.xpose.msra.mxu0 0
  %72 = vmatprep.subr.bf16.mxu0 0
  %73 = vmatpush1.bf16.xpose.msra.mxu0 0
  %74 = vmatprep.subr.bf16.mxu0 0
  %75 = vmatpush1.bf16.xpose.msra.mxu0 0
  %76 = vmatprep.subr.bf16.mxu0 0
  %77 = vmatpush1.bf16.xpose.msra.mxu0 0
  %78 = vmatprep.subr.bf16.mxu0 0
  %79 = vmatpush1.bf16.xpose.msra.mxu0 0
  %80 = vmatprep.subr.bf16.mxu0 0
  %81 = vmatpush1.bf16.xpose.msra.mxu0 0
  %82 = vmatprep.subr.bf16.mxu0 0
  %83 = vmatpush1.bf16.xpose.msra.mxu0 0
  %84 = vmatprep.subr.bf16.mxu0 0
  %85 = vmatpush1.bf16.xpose.msra.mxu0 0
  %86 = vmatprep.mubr.bf16.mxu0 0
  %87 = vmatmul.mubr.bf16.gmra.mrb[0].mxu0 %v49
  %v88 = vpop.f32.mrb[0].mxu0
  %v89 = vadd.f32 %v35, %v88
  %v90 = vpop.f32.mrb[0].mxu0
  %v91 = vpop.f32.mrb[0].mxu0
  %v92 = vpop.f32.mrb[0].mxu0
  %93 = vdwg.mxu0
  %v96 = vunpack.c.l.b16 %v22
  %v97 = vunpack.c.l.b16 %v23
  %v98 = vpack.c.b16 %v97, %v96
  %v100 = vsel %vm47, %v19, 0
  %v103 = vsel %vm47, %v98, 0
  %105 = vmatprep.subr.bf16.mxu0 0
  %106 = vmatpush1.bf16.xpose.msra.mxu0 %v103
  %107 = vmatprep.subr.bf16.mxu0 0
  %108 = vmatpush1.bf16.xpose.msra.mxu0 0
  %109 = vmatprep.subr.bf16.mxu0 0
  %110 = vmatpush1.bf16.xpose.msra.mxu0 0
  %111 = vmatprep.subr.bf16.mxu0 0
  %112 = vmatpush1.bf16.xpose.msra.mxu0 0
  %113 = vmatprep.subr.bf16.mxu0 0
  %114 = vmatpush1.bf16.xpose.msra.mxu0 0
  %115 = vmatprep.subr.bf16.mxu0 0
  %116 = vmatpush1.bf16.xpose.msra.mxu0 0
  %117 = vmatprep.subr.bf16.mxu0 0
  %118 = vmatpush1.bf16.xpose.msra.mxu0 0
  %119 = vmatprep.subr.bf16.mxu0 0
  %120 = vmatpush1.bf16.xpose.msra.mxu0 0
  %121 = vmatprep.subr.bf16.mxu0 0
  %122 = vmatpush1.bf16.xpose.msra.mxu0 0
  %123 = vmatprep.subr.bf16.mxu0 0
  %124 = vmatpush1.bf16.xpose.msra.mxu0 0
  %125 = vmatprep.subr.bf16.mxu0 0
  %126 = vmatpush1.bf16.xpose.msra.mxu0 0
  %127 = vmatprep.subr.bf16.mxu0 0
  %128 = vmatpush1.bf16.xpose.msra.mxu0 0
  %129 = vmatprep.subr.bf16.mxu0 0
  %130 = vmatpush1.bf16.xpose.msra.mxu0 0
  %131 = vmatprep.subr.bf16.mxu0 0
  %132 = vmatpush1.bf16.xpose.msra.mxu0 0
  %133 = vmatprep.subr.bf16.mxu0 0
  %134 = vmatpush1.bf16.xpose.msra.mxu0 0
  %135 = vmatprep.subr.bf16.mxu0 0
  %136 = vmatpush1.bf16.xpose.msra.mxu0 0
  %137 = vmatprep.mubr.bf16.mxu0 0
  %138 = vmatmul.mubr.bf16.gmra.mrb[0].mxu0 %v100
  %v139 = vpop.f32.mrb[0].mxu0
  %v140 = vadd.f32 %v39, %v139
  %v141 = vpop.f32.mrb[0].mxu0
  %v142 = vpop.f32.mrb[0].mxu0
  %v143 = vpop.f32.mrb[0].mxu0
  %144 = vdwg.mxu0
  %vm145 = vcmask 87040
  %v146 = vsel %vm145, %v89, -inf
  %147 = vmax.xlane.f32.xlu0 %v146
  %v148 = vpop.xlane.xlu0 %147
  %v149 = vsel %vm145, %v140, -inf
  %150 = vmax.xlane.f32.xlu0 %v149
  %v151 = vpop.xlane.xlu0 %150
  %v152 = vsub.f32 %v89, %v148
  %v153 = vsub.f32 %v140, %v151
  %v154 = vmul.f32 %v152, 1.442695
  %v155 = vpow.pop %v154
  %v156 = vmul.f32 %v153, 1.442695
  %v157 = vpow.pop %v156
  %v158 = vsel %vm145, %v155, 0.0
  %159 = vadd.xlane.f32.xlu0 %v158
  %v160 = vpop.xlane.xlu0 %159
  %v161 = vsel %vm145, %v157, 0.0
  %162 = vadd.xlane.f32.xlu0 %v161
  %v163 = vpop.xlane.xlu0 %162
  %v164 = vmul.f32 %v160, 4.0
  %v165 = vmul.f32 %v163, 4.0
  %v166 = vrcp.pop %v164
  %v167 = vrcp.pop %v165
  %v168 = vmul.f32 %v155, %v166
  %v169 = vmul.f32 %v157, %v167
  %v170 = vadd.f32 %v168, 0.0
  %v171 = vadd.f32 %v169, 0.0
  %v173 = vunpack.c.l.b16 %v18
  %v174 = vpack.c.b16 %v173, %v173
  %175 = vrot.lane.b32.xlu0 %v174, 120
  %v176 = vpop.permute.xlu0 %175
  %177 = vrot.lane.b32.xlu0 %v46, 120
  %v178 = vpop.permute.xlu0 %177
  %v180 = vsel %vm47, %v176, 0
  %v183 = vsel %vm47, %v178, 0
  %185 = vmatprep.subr.bf16.mxu0 0
  %186 = vmatpush1.bf16.xpose.msra.mxu0 %v183
  %187 = vmatprep.subr.bf16.mxu0 0
  %188 = vmatpush1.bf16.xpose.msra.mxu0 0
  %189 = vmatprep.subr.bf16.mxu0 0
  %190 = vmatpush1.bf16.xpose.msra.mxu0 0
  %191 = vmatprep.subr.bf16.mxu0 0
  %192 = vmatpush1.bf16.xpose.msra.mxu0 0
  %193 = vmatprep.subr.bf16.mxu0 0
  %194 = vmatpush1.bf16.xpose.msra.mxu0 0
  %195 = vmatprep.subr.bf16.mxu0 0
  %196 = vmatpush1.bf16.xpose.msra.mxu0 0
  %197 = vmatprep.subr.bf16.mxu0 0
  %198 = vmatpush1.bf16.xpose.msra.mxu0 0
  %199 = vmatprep.subr.bf16.mxu0 0
  %200 = vmatpush1.bf16.xpose.msra.mxu0 0
  %201 = vmatprep.subr.bf16.mxu0 0
  %202 = vmatpush1.bf16.xpose.msra.mxu0 0
  %203 = vmatprep.subr.bf16.mxu0 0
  %204 = vmatpush1.bf16.xpose.msra.mxu0 0
  %205 = vmatprep.subr.bf16.mxu0 0
  %206 = vmatpush1.bf16.xpose.msra.mxu0 0
  %207 = vmatprep.subr.bf16.mxu0 0
  %208 = vmatpush1.bf16.xpose.msra.mxu0 0
  %209 = vmatprep.subr.bf16.mxu0 0
  %210 = vmatpush1.bf16.xpose.msra.mxu0 0
  %211 = vmatprep.subr.bf16.mxu0 0
  %212 = vmatpush1.bf16.xpose.msra.mxu0 0
  %213 = vmatprep.subr.bf16.mxu0 0
  %214 = vmatpush1.bf16.xpose.msra.mxu0 0
  %215 = vmatprep.subr.bf16.mxu0 0
  %216 = vmatpush1.bf16.xpose.msra.mxu0 0
  %217 = vmatprep.mubr.bf16.mxu0 0
  %218 = vmatmul.mubr.bf16.gmra.mrb[0].mxu0 %v180
  %v219 = vpop.f32.mrb[0].mxu0
  %v220 = vadd.f32 %v35, %v219
  %v221 = vpop.f32.mrb[0].mxu0
  %v222 = vpop.f32.mrb[0].mxu0
  %v223 = vpop.f32.mrb[0].mxu0
  %224 = vdwg.mxu0
  %v226 = vunpack.c.l.b16 %v19
  %v227 = vpack.c.b16 %v226, %v226
  %228 = vrot.lane.b32.xlu0 %v227, 120
  %v229 = vpop.permute.xlu0 %228
  %230 = vrot.lane.b32.xlu0 %v98, 120
  %v231 = vpop.permute.xlu0 %230
  %v233 = vsel %vm47, %v229, 0
  %v236 = vsel %vm47, %v231, 0
  %238 = vmatprep.subr.bf16.mxu0 0
  %239 = vmatpush1.bf16.xpose.msra.mxu0 %v236
  %240 = vmatprep.subr.bf16.mxu0 0
  %241 = vmatpush1.bf16.xpose.msra.mxu0 0
  %242 = vmatprep.subr.bf16.mxu0 0
  %243 = vmatpush1.bf16.xpose.msra.mxu0 0
  %244 = vmatprep.subr.bf16.mxu0 0
  %245 = vmatpush1.bf16.xpose.msra.mxu0 0
  %246 = vmatprep.subr.bf16.mxu0 0
  %247 = vmatpush1.bf16.xpose.msra.mxu0 0
  %248 = vmatprep.subr.bf16.mxu0 0
  %249 = vmatpush1.bf16.xpose.msra.mxu0 0
  %250 = vmatprep.subr.bf16.mxu0 0
  %251 = vmatpush1.bf16.xpose.msra.mxu0 0
  %252 = vmatprep.subr.bf16.mxu0 0
  %253 = vmatpush1.bf16.xpose.msra.mxu0 0
  %254 = vmatprep.subr.bf16.mxu0 0
  %255 = vmatpush1.bf16.xpose.msra.mxu0 0
  %256 = vmatprep.subr.bf16.mxu0 0
  %257 = vmatpush1.bf16.xpose.msra.mxu0 0
  %258 = vmatprep.subr.bf16.mxu0 0
  %259 = vmatpush1.bf16.xpose.msra.mxu0 0
  %260 = vmatprep.subr.bf16.mxu0 0
  %261 = vmatpush1.bf16.xpose.msra.mxu0 0
  %262 = vmatprep.subr.bf16.mxu0 0
  %263 = vmatpush1.bf16.xpose.msra.mxu0 0
  %264 = vmatprep.subr.bf16.mxu0 0
  %265 = vmatpush1.bf16.xpose.msra.mxu0 0
  %266 = vmatprep.subr.bf16.mxu0 0
  %267 = vmatpush1.bf16.xpose.msra.mxu0 0
  %268 = vmatprep.subr.bf16.mxu0 0
  %269 = vmatpush1.bf16.xpose.msra.mxu0 0
  %270 = vmatprep.mubr.bf16.mxu0 0
  %271 = vmatmul.mubr.bf16.gmra.mrb[0].mxu0 %v233
  %v272 = vpop.f32.mrb[0].mxu0
  %v273 = vadd.f32 %v39, %v272
  %v274 = vpop.f32.mrb[0].mxu0
  %v275 = vpop.f32.mrb[0].mxu0
  %v276 = vpop.f32.mrb[0].mxu0
  %277 = vdwg.mxu0
  %v278 = vsel %vm145, %v220, -inf
  %279 = vmax.xlane.f32.xlu0 %v278
  %v280 = vpop.xlane.xlu0 %279
  %v281 = vsel %vm145, %v273, -inf
  %282 = vmax.xlane.f32.xlu0 %v281
  %v283 = vpop.xlane.xlu0 %282
  %v284 = vsub.f32 %v220, %v280
  %v285 = vsub.f32 %v273, %v283
  %v286 = vmul.f32 %v284, 1.442695
  %v287 = vpow.pop %v286
  %v288 = vmul.f32 %v285, 1.442695
  %v289 = vpow.pop %v288
  %v290 = vsel %vm145, %v287, 0.0
  %291 = vadd.xlane.f32.xlu0 %v290
  %v292 = vpop.xlane.xlu0 %291
  %v293 = vsel %vm145, %v289, 0.0
  %294 = vadd.xlane.f32.xlu0 %v293
  %v295 = vpop.xlane.xlu0 %294
  %v296 = vmul.f32 %v292, 4.0
  %v297 = vmul.f32 %v295, 4.0
  %v298 = vrcp.pop %v296
  %v299 = vrcp.pop %v297
  %v300 = vmul.f32 %v287, %v298
  %v301 = vmul.f32 %v289, %v299
  %v302 = vadd.f32 %v170, %v300
  %v303 = vadd.f32 %v171, %v301
  %304 = vrot.lane.b32.xlu0 %v174, 112
  %v305 = vpop.permute.xlu0 %304
  %306 = vrot.lane.b32.xlu0 %v46, 112
  %v307 = vpop.permute.xlu0 %306
  %v309 = vsel %vm47, %v305, 0
  %v312 = vsel %vm47, %v307, 0
  %314 = vmatprep.subr.bf16.mxu0 0
  %315 = vmatpush1.bf16.xpose.msra.mxu0 %v312
  %316 = vmatprep.subr.bf16.mxu0 0
  %317 = vmatpush1.bf16.xpose.msra.mxu0 0
  %318 = vmatprep.subr.bf16.mxu0 0
  %319 = vmatpush1.bf16.xpose.msra.mxu0 0
  %320 = vmatprep.subr.bf16.mxu0 0
  %321 = vmatpush1.bf16.xpose.msra.mxu0 0
  %322 = vmatprep.subr.bf16.mxu0 0
  %323 = vmatpush1.bf16.xpose.msra.mxu0 0
  %324 = vmatprep.subr.bf16.mxu0 0
  %325 = vmatpush1.bf16.xpose.msra.mxu0 0
  %326 = vmatprep.subr.bf16.mxu0 0
  %327 = vmatpush1.bf16.xpose.msra.mxu0 0
  %328 = vmatprep.subr.bf16.mxu0 0
  %329 = vmatpush1.bf16.xpose.msra.mxu0 0
  %330 = vmatprep.subr.bf16.mxu0 0
  %331 = vmatpush1.bf16.xpose.msra.mxu0 0
  %332 = vmatprep.subr.bf16.mxu0 0
  %333 = vmatpush1.bf16.xpose.msra.mxu0 0
  %334 = vmatprep.subr.bf16.mxu0 0
  %335 = vmatpush1.bf16.xpose.msra.mxu0 0
  %336 = vmatprep.subr.bf16.mxu0 0
  %337 = vmatpush1.bf16.xpose.msra.mxu0 0
  %338 = vmatprep.subr.bf16.mxu0 0
  %339 = vmatpush1.bf16.xpose.msra.mxu0 0
  %340 = vmatprep.subr.bf16.mxu0 0
  %341 = vmatpush1.bf16.xpose.msra.mxu0 0
  %342 = vmatprep.subr.bf16.mxu0 0
  %343 = vmatpush1.bf16.xpose.msra.mxu0 0
  %344 = vmatprep.subr.bf16.mxu0 0
  %345 = vmatpush1.bf16.xpose.msra.mxu0 0
  %346 = vmatprep.mubr.bf16.mxu0 0
  %347 = vmatmul.mubr.bf16.gmra.mrb[0].mxu0 %v309
  %v348 = vpop.f32.mrb[0].mxu0
  %v349 = vadd.f32 %v35, %v348
  %v350 = vpop.f32.mrb[0].mxu0
  %v351 = vpop.f32.mrb[0].mxu0
  %v352 = vpop.f32.mrb[0].mxu0
  %353 = vdwg.mxu0
  %354 = vrot.lane.b32.xlu0 %v227, 112
  %v355 = vpop.permute.xlu0 %354
  %356 = vrot.lane.b32.xlu0 %v98, 112
  %v357 = vpop.permute.xlu0 %356
  %v359 = vsel %vm47, %v355, 0
  %v362 = vsel %vm47, %v357, 0
  %364 = vmatprep.subr.bf16.mxu0 0
  %365 = vmatpush1.bf16.xpose.msra.mxu0 %v362
  %366 = vmatprep.subr.bf16.mxu0 0
  %367 = vmatpush1.bf16.xpose.msra.mxu0 0
  %368 = vmatprep.subr.bf16.mxu0 0
  %369 = vmatpush1.bf16.xpose.msra.mxu0 0
  %370 = vmatprep.subr.bf16.mxu0 0
  %371 = vmatpush1.bf16.xpose.msra.mxu0 0
  %372 = vmatprep.subr.bf16.mxu0 0
  %373 = vmatpush1.bf16.xpose.msra.mxu0 0
  %374 = vmatprep.subr.bf16.mxu0 0
  %375 = vmatpush1.bf16.xpose.msra.mxu0 0
  %376 = vmatprep.subr.bf16.mxu0 0
  %377 = vmatpush1.bf16.xpose.msra.mxu0 0
  %378 = vmatprep.subr.bf16.mxu0 0
  %379 = vmatpush1.bf16.xpose.msra.mxu0 0
  %380 = vmatprep.subr.bf16.mxu0 0
  %381 = vmatpush1.bf16.xpose.msra.mxu0 0
  %382 = vmatprep.subr.bf16.mxu0 0
  %383 = vmatpush1.bf16.xpose.msra.mxu0 0
  %384 = vmatprep.subr.bf16.mxu0 0
  %385 = vmatpush1.bf16.xpose.msra.mxu0 0
  %386 = vmatprep.subr.bf16.mxu0 0
  %387 = vmatpush1.bf16.xpose.msra.mxu0 0
  %388 = vmatprep.subr.bf16.mxu0 0
  %389 = vmatpush1.bf16.xpose.msra.mxu0 0
  %390 = vmatprep.subr.bf16.mxu0 0
  %391 = vmatpush1.bf16.xpose.msra.mxu0 0
  %392 = vmatprep.subr.bf16.mxu0 0
  %393 = vmatpush1.bf16.xpose.msra.mxu0 0
  %394 = vmatprep.subr.bf16.mxu0 0
  %395 = vmatpush1.bf16.xpose.msra.mxu0 0
  %396 = vmatprep.mubr.bf16.mxu0 0
  %397 = vmatmul.mubr.bf16.gmra.mrb[0].mxu0 %v359
  %v398 = vpop.f32.mrb[0].mxu0
  %v399 = vadd.f32 %v39, %v398
  %v400 = vpop.f32.mrb[0].mxu0
  %v401 = vpop.f32.mrb[0].mxu0
  %v402 = vpop.f32.mrb[0].mxu0
  %403 = vdwg.mxu0
  %v404 = vsel %vm145, %v349, -inf
  %405 = vmax.xlane.f32.xlu0 %v404
  %v406 = vpop.xlane.xlu0 %405
  %v407 = vsel %vm145, %v399, -inf
  %408 = vmax.xlane.f32.xlu0 %v407
  %v409 = vpop.xlane.xlu0 %408
  %v410 = vsub.f32 %v349, %v406
  %v411 = vsub.f32 %v399, %v409
  %v412 = vmul.f32 %v410, 1.442695
  %v413 = vpow.pop %v412
  %v414 = vmul.f32 %v411, 1.442695
  %v415 = vpow.pop %v414
  %v416 = vsel %vm145, %v413, 0.0
  %417 = vadd.xlane.f32.xlu0 %v416
  %v418 = vpop.xlane.xlu0 %417
  %v419 = vsel %vm145, %v415, 0.0
  %420 = vadd.xlane.f32.xlu0 %v419
  %v421 = vpop.xlane.xlu0 %420
  %v422 = vmul.f32 %v418, 4.0
  %v423 = vmul.f32 %v421, 4.0
  %v424 = vrcp.pop %v422
  %v425 = vrcp.pop %v423
  %v426 = vmul.f32 %v413, %v424
  %v427 = vmul.f32 %v415, %v425
  %v428 = vadd.f32 %v302, %v426
  %v429 = vadd.f32 %v303, %v427
  %430 = vrot.lane.b32.xlu0 %v174, 104
  %v431 = vpop.permute.xlu0 %430
  %432 = vrot.lane.b32.xlu0 %v46, 104
  %v433 = vpop.permute.xlu0 %432
  %v435 = vsel %vm47, %v431, 0
  %v438 = vsel %vm47, %v433, 0
  %440 = vmatprep.subr.bf16.mxu0 0
  %441 = vmatpush1.bf16.xpose.msra.mxu0 %v438
  %442 = vmatprep.subr.bf16.mxu0 0
  %443 = vmatpush1.bf16.xpose.msra.mxu0 0
  %444 = vmatprep.subr.bf16.mxu0 0
  %445 = vmatpush1.bf16.xpose.msra.mxu0 0
  %446 = vmatprep.subr.bf16.mxu0 0
  %447 = vmatpush1.bf16.xpose.msra.mxu0 0
  %448 = vmatprep.subr.bf16.mxu0 0
  %449 = vmatpush1.bf16.xpose.msra.mxu0 0
  %450 = vmatprep.subr.bf16.mxu0 0
  %451 = vmatpush1.bf16.xpose.msra.mxu0 0
  %452 = vmatprep.subr.bf16.mxu0 0
  %453 = vmatpush1.bf16.xpose.msra.mxu0 0
  %454 = vmatprep.subr.bf16.mxu0 0
  %455 = vmatpush1.bf16.xpose.msra.mxu0 0
  %456 = vmatprep.subr.bf16.mxu0 0
  %457 = vmatpush1.bf16.xpose.msra.mxu0 0
  %458 = vmatprep.subr.bf16.mxu0 0
  %459 = vmatpush1.bf16.xpose.msra.mxu0 0
  %460 = vmatprep.subr.bf16.mxu0 0
  %461 = vmatpush1.bf16.xpose.msra.mxu0 0
  %462 = vmatprep.subr.bf16.mxu0 0
  %463 = vmatpush1.bf16.xpose.msra.mxu0 0
  %464 = vmatprep.subr.bf16.mxu0 0
  %465 = vmatpush1.bf16.xpose.msra.mxu0 0
  %466 = vmatprep.subr.bf16.mxu0 0
  %467 = vmatpush1.bf16.xpose.msra.mxu0 0
  %468 = vmatprep.subr.bf16.mxu0 0
  %469 = vmatpush1.bf16.xpose.msra.mxu0 0
  %470 = vmatprep.subr.bf16.mxu0 0
  %471 = vmatpush1.bf16.xpose.msra.mxu0 0
  %472 = vmatprep.mubr.bf16.mxu0 0
  %473 = vmatmul.mubr.bf16.gmra.mrb[0].mxu0 %v435
  %v474 = vpop.f32.mrb[0].mxu0
  %v475 = vadd.f32 %v35, %v474
  %v476 = vpop.f32.mrb[0].mxu0
  %v477 = vpop.f32.mrb[0].mxu0
  %v478 = vpop.f32.mrb[0].mxu0
  %479 = vdwg.mxu0
  %480 = vrot.lane.b32.xlu0 %v227, 104
  %v481 = vpop.permute.xlu0 %480
  %482 = vrot.lane.b32.xlu0 %v98, 104
  %v483 = vpop.permute.xlu0 %482
  %v485 = vsel %vm47, %v481, 0
  %v488 = vsel %vm47, %v483, 0
  %490 = vmatprep.subr.bf16.mxu0 0
  %491 = vmatpush1.bf16.xpose.msra.mxu0 %v488
  %492 = vmatprep.subr.bf16.mxu0 0
  %493 = vmatpush1.bf16.xpose.msra.mxu0 0
  %494 = vmatprep.subr.bf16.mxu0 0
  %495 = vmatpush1.bf16.xpose.msra.mxu0 0
  %496 = vmatprep.subr.bf16.mxu0 0
  %497 = vmatpush1.bf16.xpose.msra.mxu0 0
  %498 = vmatprep.subr.bf16.mxu0 0
  %499 = vmatpush1.bf16.xpose.msra.mxu0 0
  %500 = vmatprep.subr.bf16.mxu0 0
  %501 = vmatpush1.bf16.xpose.msra.mxu0 0
  %502 = vmatprep.subr.bf16.mxu0 0
  %503 = vmatpush1.bf16.xpose.msra.mxu0 0
  %504 = vmatprep.subr.bf16.mxu0 0
  %505 = vmatpush1.bf16.xpose.msra.mxu0 0
  %506 = vmatprep.subr.bf16.mxu0 0
  %507 = vmatpush1.bf16.xpose.msra.mxu0 0
  %508 = vmatprep.subr.bf16.mxu0 0
  %509 = vmatpush1.bf16.xpose.msra.mxu0 0
  %510 = vmatprep.subr.bf16.mxu0 0
  %511 = vmatpush1.bf16.xpose.msra.mxu0 0
  %512 = vmatprep.subr.bf16.mxu0 0
  %513 = vmatpush1.bf16.xpose.msra.mxu0 0
  %514 = vmatprep.subr.bf16.mxu0 0
  %515 = vmatpush1.bf16.xpose.msra.mxu0 0
  %516 = vmatprep.subr.bf16.mxu0 0
  %517 = vmatpush1.bf16.xpose.msra.mxu0 0
  %518 = vmatprep.subr.bf16.mxu0 0
  %519 = vmatpush1.bf16.xpose.msra.mxu0 0
  %520 = vmatprep.subr.bf16.mxu0 0
  %521 = vmatpush1.bf16.xpose.msra.mxu0 0
  %522 = vmatprep.mubr.bf16.mxu0 0
  %523 = vmatmul.mubr.bf16.gmra.mrb[0].mxu0 %v485
  %v524 = vpop.f32.mrb[0].mxu0
  %v525 = vadd.f32 %v39, %v524
  %v526 = vpop.f32.mrb[0].mxu0
  %v527 = vpop.f32.mrb[0].mxu0
  %v528 = vpop.f32.mrb[0].mxu0
  %529 = vdwg.mxu0
  %v530 = vsel %vm145, %v475, -inf
  %531 = vmax.xlane.f32.xlu0 %v530
  %v532 = vpop.xlane.xlu0 %531
  %v533 = vsel %vm145, %v525, -inf
  %534 = vmax.xlane.f32.xlu0 %v533
  %v535 = vpop.xlane.xlu0 %534
  %v536 = vsub.f32 %v475, %v532
  %v537 = vsub.f32 %v525, %v535
  %v538 = vmul.f32 %v536, 1.442695
  %v539 = vpow.pop %v538
  %v540 = vmul.f32 %v537, 1.442695
  %v541 = vpow.pop %v540
  %v542 = vsel %vm145, %v539, 0.0
  %543 = vadd.xlane.f32.xlu0 %v542
  %v544 = vpop.xlane.xlu0 %543
  %v545 = vsel %vm145, %v541, 0.0
  %546 = vadd.xlane.f32.xlu0 %v545
  %v547 = vpop.xlane.xlu0 %546
  %v548 = vmul.f32 %v544, 4.0
  %v549 = vmul.f32 %v547, 4.0
  %v550 = vrcp.pop %v548
  %v551 = vrcp.pop %v549
  %v552 = vmul.f32 %v539, %v550
  %v553 = vmul.f32 %v541, %v551
  %v554 = vadd.f32 %v428, %v552
  %v555 = vadd.f32 %v429, %v553
  %v556 = vpack.c.bf16 %v554, %v554
  %v557 = vpack.c.bf16 %v555, %v555
  %v560 = vunpack.c.l.b16 %v24
  %v561 = vunpack.c.l.b16 %v25
  %v562 = vpack.c.b16 %v561, %v560
  %vm563 = vcmask 89088
  %v565 = vsel %vm563, %v556, 0
  %vm567 = vcmask 1044480
  %vm568 = vcmask 1045504
  %v569 = vsel %vm567, 4294967295, 65535
  %v570 = vsel %vm568, %v569, 0
  %v572 = vand.u32 %v562, %v570
  %574 = vmatprep.subr.bf16.mxu0 0
  %575 = vmatpush1.bf16.msra.mxu0 %v572
  %576 = vmatprep.subr.bf16.mxu0 0
  %577 = vmatpush1.bf16.msra.mxu0 0
  %578 = vmatprep.subr.bf16.mxu0 0
  %579 = vmatpush1.bf16.msra.mxu0 0
  %580 = vmatprep.subr.bf16.mxu0 0
  %581 = vmatpush1.bf16.msra.mxu0 0
  %582 = vmatprep.subr.bf16.mxu0 0
  %583 = vmatpush1.bf16.msra.mxu0 0
  %584 = vmatprep.subr.bf16.mxu0 0
  %585 = vmatpush1.bf16.msra.mxu0 0
  %586 = vmatprep.subr.bf16.mxu0 0
  %587 = vmatpush1.bf16.msra.mxu0 0
  %588 = vmatprep.subr.bf16.mxu0 0
  %589 = vmatpush1.bf16.msra.mxu0 0
  %590 = vmatprep.subr.bf16.mxu0 0
  %591 = vmatpush1.bf16.msra.mxu0 0
  %592 = vmatprep.subr.bf16.mxu0 0
  %593 = vmatpush1.bf16.msra.mxu0 0
  %594 = vmatprep.subr.bf16.mxu0 0
  %595 = vmatpush1.bf16.msra.mxu0 0
  %596 = vmatprep.subr.bf16.mxu0 0
  %597 = vmatpush1.bf16.msra.mxu0 0
  %598 = vmatprep.subr.bf16.mxu0 0
  %599 = vmatpush1.bf16.msra.mxu0 0
  %600 = vmatprep.subr.bf16.mxu0 0
  %601 = vmatpush1.bf16.msra.mxu0 0
  %602 = vmatprep.subr.bf16.mxu0 0
  %603 = vmatpush1.bf16.msra.mxu0 0
  %604 = vmatprep.subr.bf16.mxu0 0
  %605 = vmatpush1.bf16.msra.mxu0 0
  %606 = vmatprep.mubr.bf16.mxu0 0
  %607 = vmatmul.mubr.bf16.gmra.mrb[0].mxu0 %v565
  %v608 = vpop.f32.mrb[0].mxu0
  %v609 = vadd.f32 0.0, %v608
  %v610 = vpop.f32.mrb[0].mxu0
  %v611 = vpop.f32.mrb[0].mxu0
  %v612 = vpop.f32.mrb[0].mxu0
  %613 = vdwg.mxu0
  %v616 = vunpack.c.l.b16 %v26
  %v617 = vunpack.c.l.b16 %v27
  %v618 = vpack.c.b16 %v617, %v616
  %v620 = vsel %vm563, %v557, 0
  %v623 = vand.u32 %v618, %v570
  %625 = vmatprep.subr.bf16.mxu0 0
  %626 = vmatpush1.bf16.msra.mxu0 %v623
  %627 = vmatprep.subr.bf16.mxu0 0
  %628 = vmatpush1.bf16.msra.mxu0 0
  %629 = vmatprep.subr.bf16.mxu0 0
  %630 = vmatpush1.bf16.msra.mxu0 0
  %631 = vmatprep.subr.bf16.mxu0 0
  %632 = vmatpush1.bf16.msra.mxu0 0
  %633 = vmatprep.subr.bf16.mxu0 0
  %634 = vmatpush1.bf16.msra.mxu0 0
  %635 = vmatprep.subr.bf16.mxu0 0
  %636 = vmatpush1.bf16.msra.mxu0 0
  %637 = vmatprep.subr.bf16.mxu0 0
  %638 = vmatpush1.bf16.msra.mxu0 0
  %639 = vmatprep.subr.bf16.mxu0 0
  %640 = vmatpush1.bf16.msra.mxu0 0
  %641 = vmatprep.subr.bf16.mxu0 0
  %642 = vmatpush1.bf16.msra.mxu0 0
  %643 = vmatprep.subr.bf16.mxu0 0
  %644 = vmatpush1.bf16.msra.mxu0 0
  %645 = vmatprep.subr.bf16.mxu0 0
  %646 = vmatpush1.bf16.msra.mxu0 0
  %647 = vmatprep.subr.bf16.mxu0 0
  %648 = vmatpush1.bf16.msra.mxu0 0
  %649 = vmatprep.subr.bf16.mxu0 0
  %650 = vmatpush1.bf16.msra.mxu0 0
  %651 = vmatprep.subr.bf16.mxu0 0
  %652 = vmatpush1.bf16.msra.mxu0 0
  %653 = vmatprep.subr.bf16.mxu0 0
  %654 = vmatpush1.bf16.msra.mxu0 0
  %655 = vmatprep.subr.bf16.mxu0 0
  %656 = vmatpush1.bf16.msra.mxu0 0
  %657 = vmatprep.mubr.bf16.mxu0 0
  %658 = vmatmul.mubr.bf16.gmra.mrb[0].mxu0 %v620
  %v659 = vpop.f32.mrb[0].mxu0
  %v660 = vadd.f32 0.0, %v659
  %v661 = vpop.f32.mrb[0].mxu0
  %v662 = vpop.f32.mrb[0].mxu0
  %v663 = vpop.f32.mrb[0].mxu0
  %664 = vdwg.mxu0
  %v665 = vpack.c.bf16 %v609, %v609
  %v666 = vpack.c.bf16 %v660, %v660
  %vm667 = vcmask 256000
  %668 = vst.msk [vmem:[%s4] sm:$0x7] %vm667, %v665
  %669 = vst.msk [vmem:[%s4 + $0x4] sm:$0x7] %vm667, %v666
  // Predicated region
  $region18: #{normal_sublayer_forward.8} parent=0 // pred_check
    _
  $region19: #{normal_sublayer_forward.8} parent=0 // pred_check_branch
    %671 = sbr.rel (0) target = $region21
  $region20: #{normal_sublayer_forward.8} parent=0 // pred_region
    _
  $region21: #{normal_sublayer_forward.8} parent=0 // pred_fallthru
    _
  // Predicated region
  $region22: #{normal_sublayer_forward.8} parent=0 // pred_check
    _
  $region23: #{normal_sublayer_forward.8} parent=0 // pred_check_branch
    %673 = sbr.rel (0) target = $region25
  $region24: #{normal_sublayer_forward.8} parent=0 // pred_region
    _
  $region25: #{normal_sublayer_forward.8} parent=0 // pred_fallthru
    _

// kernel: normal_sublayer_forward.10
$region0: #{normal_sublayer_forward.10}
  #allocation0 [shape = 'u32[]', space=smem, size = 0x4, offset = 0x4, fixed_abs, tag = 'smem constant byte address 0x4 - core index']
  #allocation1 [shape = 'u32[144,128]{1,0:T(1,128)}', space=vmem, size = 0x12000, scoped, tag = 'internal scratch']
  %s0 = inlined_call_operand.vmem [shape: f32[16,32], index: 0, kind: input, shape index: {}]
  %s1 = inlined_call_operand.vmem [shape: bf16[16,48], index: 1, kind: input, shape index: {}]
  %s2 = inlined_call_operand.vmem [shape: bf16[32,32], index: 2, kind: input, shape index: {}]
  %s3 = inlined_call_operand.vmem [shape: bf16[48,32], index: 3, kind: input, shape index: {}]
  %s4 = inlined_call_operand.vmem [shape: f32[1,32], index: 4, kind: input, shape index: {}]
  %s5 = inlined_call_operand.hbm [shape: f32[16,32], index: 5, kind: output, shape index: {}]
  %s6 = sld [smem:[#allocation0]]
  $region30: #{normal_sublayer_forward.10} parent=0
    _
  %s8 = ssub.s32 1, %s6
  %s9 = scalar_select 0, %s8, %s6
  $region1: #{normal_sublayer_forward.10} parent=0
    #allocation2 [shape = 'u8[8192]{0}', space=vmem, size = 0x2000, scoped, tag = 'output window, operand 0, single buffered']
    #allocation3 [shape = 's32[1]{0}', space=sflag, size = 0x4, scoped, tag = 'scoped memory for normal_sublayer_forward.10']
    %10 = vsyncpa [#allocation3], 0
    // Predicated region
    $region2: #{normal_sublayer_forward.10} parent=1 // pred_check
      _
    $region3: #{normal_sublayer_forward.10} parent=1 // pred_check_branch
      %12 = sbr.rel (0) target = $region5
    $region4: #{normal_sublayer_forward.10} parent=1 // pred_region
      _
    $region5: #{normal_sublayer_forward.10} parent=1 // pred_fallthru
      _
    // Predicated region
    $region6: #{normal_sublayer_forward.10} parent=1 // pred_check
      _
    $region7: #{normal_sublayer_forward.10} parent=1 // pred_check_branch
      %14 = sbr.rel (0) target = $region9
    $region8: #{normal_sublayer_forward.10} parent=1 // pred_region
      _
    $region9: #{normal_sublayer_forward.10} parent=1 // pred_fallthru
      _
    // Predicated region
    $region10: #{normal_sublayer_forward.10} parent=1 // pred_check
      _
    $region11: #{normal_sublayer_forward.10} parent=1 // pred_check_branch
      %16 = sbr.rel (0) target = $region13
    $region12: #{normal_sublayer_forward.10} parent=1 // pred_region
      _
    $region13: #{normal_sublayer_forward.10} parent=1 // pred_fallthru
      _
    // Predicated region
    $region14: #{normal_sublayer_forward.10} parent=1 // pred_check
      _
    $region15: #{normal_sublayer_forward.10} parent=1 // pred_check_branch
      %18 = sbr.rel (0) target = $region17
    $region16: #{normal_sublayer_forward.10} parent=1 // pred_region
      _
    $region17: #{normal_sublayer_forward.10} parent=1 // pred_fallthru
      _
    // Predicated region
    $region18: #{normal_sublayer_forward.10} parent=1 // pred_check
      _
    $region19: #{normal_sublayer_forward.10} parent=1 // pred_check_branch
      %20 = sbr.rel (0) target = $region21
    $region20: #{normal_sublayer_forward.10} parent=1 // pred_region
      _
    $region21: #{normal_sublayer_forward.10} parent=1 // pred_fallthru
      _
    %v22 = vld [vmem:[%s0] sm:$0xff]
    %v23 = vld [vmem:[%s0 + $0x8] sm:$0xff]
    %v24 = vpack.c.bf16 %v23, %v22
    %v25 = vld [vmem:[%s2] sm:$0xf]
    %v26 = vld [vmem:[%s2 + $0x4] sm:$0xf]
    %v27 = vld [vmem:[%s2 + $0x8] sm:$0xf]
    %v28 = vld [vmem:[%s2 + $0xc] sm:$0xf]
    %v29 = vld [vmem:[%s1] sm:$0xf]
    %v30 = vld [vmem:[%s1 + $0x4] sm:$0xf]
    %v31 = vld [vmem:[%s3] sm:$0xf]
    %v32 = vld [vmem:[%s3 + $0x4] sm:$0xf]
    %v33 = vld [vmem:[%s3 + $0x8] sm:$0xf]
    %v34 = vld [vmem:[%s3 + $0xc] sm:$0xf]
    %v35 = vld [vmem:[%s3 + $0x10] sm:$0xf]
    %v36 = vld [vmem:[%s3 + $0x14] sm:$0xf]
    %v39 = vunpack.c.l.b16 %v29
    %v40 = vunpack.c.l.b16 %v30
    %v41 = vpack.c.b16 %v40, %v39
    %v48 = vunpack.c.l.b16 %v31
    %v49 = vunpack.c.l.b16 %v32
    %v50 = vunpack.c.l.b16 %v33
    %v51 = vunpack.c.l.b16 %v34
    %v52 = vunpack.c.l.b16 %v35
    %v53 = vunpack.c.l.b16 %v36
    %v54 = vpack.c.b16 %v49, %v48
    %v55 = vpack.c.b16 %v51, %v50
    %v56 = vpack.c.b16 %v53, %v52
    %vm60 = vcmask 392192
    %v62 = vsel %vm60, %v41, 0
    %64 = vmatprep.subr.bf16.mxu0 0
    %65 = vmatpush1.bf16.msra.mxu0 %v54
    %66 = vmatprep.subr.bf16.mxu0 0
    %67 = vmatpush1.bf16.msra.mxu0 %v55
    %68 = vmatprep.subr.bf16.mxu0 0
    %69 = vmatpush1.bf16.msra.mxu0 %v56
    %70 = vmatprep.subr.bf16.mxu0 0
    %71 = vmatpush1.bf16.msra.mxu0 0
    %72 = vmatprep.subr.bf16.mxu0 0
    %73 = vmatpush1.bf16.msra.mxu0 0
    %74 = vmatprep.subr.bf16.mxu0 0
    %75 = vmatpush1.bf16.msra.mxu0 0
    %76 = vmatprep.subr.bf16.mxu0 0
    %77 = vmatpush1.bf16.msra.mxu0 0
    %78 = vmatprep.subr.bf16.mxu0 0
    %79 = vmatpush1.bf16.msra.mxu0 0
    %80 = vmatprep.subr.bf16.mxu0 0
    %81 = vmatpush1.bf16.msra.mxu0 0
    %82 = vmatprep.subr.bf16.mxu0 0
    %83 = vmatpush1.bf16.msra.mxu0 0
    %84 = vmatprep.subr.bf16.mxu0 0
    %85 = vmatpush1.bf16.msra.mxu0 0
    %86 = vmatprep.subr.bf16.mxu0 0
    %87 = vmatpush1.bf16.msra.mxu0 0
    %88 = vmatprep.subr.bf16.mxu0 0
    %89 = vmatpush1.bf16.msra.mxu0 0
    %90 = vmatprep.subr.bf16.mxu0 0
    %91 = vmatpush1.bf16.msra.mxu0 0
    %92 = vmatprep.subr.bf16.mxu0 0
    %93 = vmatpush1.bf16.msra.mxu0 0
    %94 = vmatprep.subr.bf16.mxu0 0
    %95 = vmatpush1.bf16.msra.mxu0 0
    %96 = vmatprep.mubr.bf16.mxu0 0
    %97 = vmatmul.mubr.bf16.gmra.mrb[0].mxu0 %v62
    %v98 = vpop.f32.mrb[0].mxu0
    %v99 = vadd.f32 0.0, %v98
    %v100 = vpop.f32.mrb[0].mxu0
    %v101 = vpop.f32.mrb[0].mxu0
    %v102 = vadd.f32 0.0, %v101
    %v103 = vpop.f32.mrb[0].mxu0
    %104 = vdwg.mxu0
    %v109 = vunpack.c.l.b16 %v25
    %v110 = vunpack.c.l.b16 %v26
    %v111 = vunpack.c.l.b16 %v27
    %v112 = vunpack.c.l.b16 %v28
    %v113 = vpack.c.b16 %v110, %v109
    %v114 = vpack.c.b16 %v112, %v111
    %vm117 = vcmask 261120
    %v119 = vsel %vm117, %v24, 0
    %121 = vmatprep.subr.bf16.mxu0 0
    %122 = vmatpush1.bf16.msra.mxu0 %v113
    %123 = vmatprep.subr.bf16.mxu0 0
    %124 = vmatpush1.bf16.msra.mxu0 %v114
    %125 = vmatprep.subr.bf16.mxu0 0
    %126 = vmatpush1.bf16.msra.mxu0 0
    %127 = vmatprep.subr.bf16.mxu0 0
    %128 = vmatpush1.bf16.msra.mxu0 0
    %129 = vmatprep.subr.bf16.mxu0 0
    %130 = vmatpush1.bf16.msra.mxu0 0
    %131 = vmatprep.subr.bf16.mxu0 0
    %132 = vmatpush1.bf16.msra.mxu0 0
    %133 = vmatprep.subr.bf16.mxu0 0
    %134 = vmatpush1.bf16.msra.mxu0 0
    %135 = vmatprep.subr.bf16.mxu0 0
    %136 = vmatpush1.bf16.msra.mxu0 0
    %137 = vmatprep.subr.bf16.mxu0 0
    %138 = vmatpush1.bf16.msra.mxu0 0
    %139 = vmatprep.subr.bf16.mxu0 0
    %140 = vmatpush1.bf16.msra.mxu0 0
    %141 = vmatprep.subr.bf16.mxu0 0
    %142 = vmatpush1.bf16.msra.mxu0 0
    %143 = vmatprep.subr.bf16.mxu0 0
    %144 = vmatpush1.bf16.msra.mxu0 0
    %145 = vmatprep.subr.bf16.mxu0 0
    %146 = vmatpush1.bf16.msra.mxu0 0
    %147 = vmatprep.subr.bf16.mxu0 0
    %148 = vmatpush1.bf16.msra.mxu0 0
    %149 = vmatprep.subr.bf16.mxu0 0
    %150 = vmatpush1.bf16.msra.mxu0 0
    %151 = vmatprep.subr.bf16.mxu0 0
    %152 = vmatpush1.bf16.msra.mxu0 0
    %153 = vmatprep.mubr.bf16.mxu0 0
    %154 = vmatmul.mubr.bf16.gmra.mrb[0].mxu0 %v119
    %v155 = vpop.f32.mrb[0].mxu0
    %v156 = vadd.f32 %v99, %v155
    %v157 = vpop.f32.mrb[0].mxu0
    %v158 = vpop.f32.mrb[0].mxu0
    %v159 = vadd.f32 %v102, %v158
    %v160 = vpop.f32.mrb[0].mxu0
    %161 = vdwg.mxu0
    %v162 = vld [vmem:[%s4] sm:$0x1]
    %v164 = vlaneseq
    %v165 = vshrl.u32 %v164, 7
    %v166 = vsub.s32 0, %v165
    %v167 = vrot.slane %v162, %v166
    %v169 = vadd.f32 %v156, %v167
    %v170 = vadd.f32 %v159, %v167
    %v171 = vmax.f32 %v169, 0.0
    %v172 = vmax.f32 %v170, 0.0
    %v173 = vadd.f32 %v22, %v171
    %v174 = vadd.f32 %v23, %v172
    %175 = vst.msk [vmem:[#allocation2] sm:$0xff] %vm117, %v173
    %176 = vst.msk [vmem:[#allocation2 + $0x8] sm:$0xff] %vm117, %v174
    // Predicated region
    $region22: #{normal_sublayer_forward.10} parent=1 // pred_check
      _
    $region23: #{normal_sublayer_forward.10} parent=1 // pred_check_branch
      %178 = sbr.rel (0) target = $region25
    $region24: #{normal_sublayer_forward.10} parent=1 // pred_region
      %s180 = ssub.s32 256, 256
      %181 = vsyncadd [#allocation3], %s180
      %s182 = sshll.u32 [#allocation2], 4
      %s183 = int_to_ptr.vmem [resolvable:$true] %s182
      %188 = dma.vmem_to_hbm [thread:$0]  %s183, 256, %s5, [#allocation3], 128, 128, 8
    $region25: #{normal_sublayer_forward.10} parent=1 // pred_fallthru
      _
    // Predicated region
    $region26: #{normal_sublayer_forward.10} parent=1 // pred_check
      _
    $region27: #{normal_sublayer_forward.10} parent=1 // pred_check_branch
      %190 = sbr.rel (0) target = $region29
    $region28: #{normal_sublayer_forward.10} parent=1 // pred_region
      %191 = dma.done [#allocation3], 256
    $region29: #{normal_sublayer_forward.10} parent=1 // pred_fallthru
      _
    %192 = vsyncpa [#allocation3], 1

// kernel: normal_sublayer_forward.9
$region0: #{normal_sublayer_forward.9}
  #allocation0 [shape = 'u32[]', space=smem, size = 0x4, offset = 0x4, fixed_abs, tag = 'smem constant byte address 0x4 - core index']
  #allocation1 [shape = 'u32[144,128]{1,0:T(1,128)}', space=vmem, size = 0x12000, scoped, tag = 'internal scratch']
  %s0 = inlined_call_operand.vmem [shape: bf16[2,8,32], index: 0, kind: input, shape index: {}]
  %s1 = inlined_call_operand.vmem [shape: bf16[2,9,32], index: 1, kind: input, shape index: {}]
  %s2 = inlined_call_operand.vmem [shape: bf16[2,9,48], index: 2, kind: input, shape index: {}]
  %s3 = inlined_call_operand.vmem [shape: f32[2,1,9], index: 3, kind: input, shape index: {}]
  %s4 = inlined_call_operand.vmem [shape: bf16[2,8,48], index: 4, kind: output, shape index: {}]
  %s5 = sld [smem:[#allocation0]]
  $region26: #{normal_sublayer_forward.9} parent=0
    _
  %s7 = ssub.s32 1, %s5
  %s8 = scalar_select 0, %s7, %s5
  // Predicated region
  $region2: #{normal_sublayer_forward.9} parent=0 // pred_check
    _
  $region3: #{normal_sublayer_forward.9} parent=0 // pred_check_branch
    %10 = sbr.rel (0) target = $region5
  $region4: #{normal_sublayer_forward.9} parent=0 // pred_region
    _
  $region5: #{normal_sublayer_forward.9} parent=0 // pred_fallthru
    _
  // Predicated region
  $region6: #{normal_sublayer_forward.9} parent=0 // pred_check
    _
  $region7: #{normal_sublayer_forward.9} parent=0 // pred_check_branch
    %12 = sbr.rel (0) target = $region9
  $region8: #{normal_sublayer_forward.9} parent=0 // pred_region
    _
  $region9: #{normal_sublayer_forward.9} parent=0 // pred_fallthru
    _
  // Predicated region
  $region10: #{normal_sublayer_forward.9} parent=0 // pred_check
    _
  $region11: #{normal_sublayer_forward.9} parent=0 // pred_check_branch
    %14 = sbr.rel (0) target = $region13
  $region12: #{normal_sublayer_forward.9} parent=0 // pred_region
    _
  $region13: #{normal_sublayer_forward.9} parent=0 // pred_fallthru
    _
  // Predicated region
  $region14: #{normal_sublayer_forward.9} parent=0 // pred_check
    _
  $region15: #{normal_sublayer_forward.9} parent=0 // pred_check_branch
    %16 = sbr.rel (0) target = $region17
  $region16: #{normal_sublayer_forward.9} parent=0 // pred_region
    _
  $region17: #{normal_sublayer_forward.9} parent=0 // pred_fallthru
    _
  %v18 = vld [vmem:[%s0] sm:$0xf]
  %v19 = vld [vmem:[%s0 + $0x4] sm:$0xf]
  %v20 = vld [vmem:[%s1] sm:$0xf]
  %v21 = vld [vmem:[%s1 + $0x4] sm:$0x1]
  %v22 = vld [vmem:[%s1 + $0x8] sm:$0xf]
  %v23 = vld [vmem:[%s1 + $0xc] sm:$0x1]
  %v24 = vld [vmem:[%s2] sm:$0xf]
  %v25 = vld [vmem:[%s2 + $0x4] sm:$0x1]
  %v26 = vld [vmem:[%s2 + $0x8] sm:$0xf]
  %v27 = vld [vmem:[%s2 + $0xc] sm:$0x1]
  %v28 = vld [vmem:[%s3] sm:$0x1]
  %v29 = vld [vmem:[%s3 + $0x1] sm:$0x1]
  %v32 = vlaneseq
  %v33 = vshrl.u32 %v32, 7
  %v34 = vsub.s32 0, %v33
  %v35 = vrot.slane %v28, %v34
  %v36 = vlaneseq
  %v37 = vshrl.u32 %v36, 7
  %v38 = vsub.s32 0, %v37
  %v39 = vrot.slane %v29, %v38
  %v44 = vunpack.c.l.b16 %v20
  %v45 = vunpack.c.l.b16 %v21
  %v46 = vpack.c.b16 %v45, %v44
  %vm47 = vcmask 64512
  %v49 = vsel %vm47, %v18, 0
  %v52 = vsel %vm47, %v46, 0
  %54 = vmatprep.subr.bf16.mxu0 0
  %55 = vmatpush1.bf16.xpose.msra.mxu0 %v52
  %56 = vmatprep.subr.bf16.mxu0 0
  %57 = vmatpush1.bf16.xpose.msra.mxu0 0
  %58 = vmatprep.subr.bf16.mxu0 0
  %59 = vmatpush1.bf16.xpose.msra.mxu0 0
  %60 = vmatprep.subr.bf16.mxu0 0
  %61 = vmatpush1.bf16.xpose.msra.mxu0 0
  %62 = vmatprep.subr.bf16.mxu0 0
  %63 = vmatpush1.bf16.xpose.msra.mxu0 0
  %64 = vmatprep.subr.bf16.mxu0 0
  %65 = vmatpush1.bf16.xpose.msra.mxu0 0
  %66 = vmatprep.subr.bf16.mxu0 0
  %67 = vmatpush1.bf16.xpose.msra.mxu0 0
  %68 = vmatprep.subr.bf16.mxu0 0
  %69 = vmatpush1.bf16.xpose.msra.mxu0 0
  %70 = vmatprep.subr.bf16.mxu0 0
  %71 = vmatpush1.bf16.xpose.msra.mxu0 0
  %72 = vmatprep.subr.bf16.mxu0 0
  %73 = vmatpush1.bf16.xpose.msra.mxu0 0
  %74 = vmatprep.subr.bf16.mxu0 0
  %75 = vmatpush1.bf16.xpose.msra.mxu0 0
  %76 = vmatprep.subr.bf16.mxu0 0
  %77 = vmatpush1.bf16.xpose.msra.mxu0 0
  %78 = vmatprep.subr.bf16.mxu0 0
  %79 = vmatpush1.bf16.xpose.msra.mxu0 0
  %80 = vmatprep.subr.bf16.mxu0 0
  %81 = vmatpush1.bf16.xpose.msra.mxu0 0
  %82 = vmatprep.subr.bf16.mxu0 0
  %83 = vmatpush1.bf16.xpose.msra.mxu0 0
  %84 = vmatprep.subr.bf16.mxu0 0
  %85 = vmatpush1.bf16.xpose.msra.mxu0 0
  %86 = vmatprep.mubr.bf16.mxu0 0
  %87 = vmatmul.mubr.bf16.gmra.mrb[0].mxu0 %v49
  %v88 = vpop.f32.mrb[0].mxu0
  %v89 = vadd.f32 %v35, %v88
  %v90 = vpop.f32.mrb[0].mxu0
  %v91 = vpop.f32.mrb[0].mxu0
  %v92 = vpop.f32.mrb[0].mxu0
  %93 = vdwg.mxu0
  %v96 = vunpack.c.l.b16 %v22
  %v97 = vunpack.c.l.b16 %v23
  %v98 = vpack.c.b16 %v97, %v96
  %v100 = vsel %vm47, %v19, 0
  %v103 = vsel %vm47, %v98, 0
  %105 = vmatprep.subr.bf16.mxu0 0
  %106 = vmatpush1.bf16.xpose.msra.mxu0 %v103
  %107 = vmatprep.subr.bf16.mxu0 0
  %108 = vmatpush1.bf16.xpose.msra.mxu0 0
  %109 = vmatprep.subr.bf16.mxu0 0
  %110 = vmatpush1.bf16.xpose.msra.mxu0 0
  %111 = vmatprep.subr.bf16.mxu0 0
  %112 = vmatpush1.bf16.xpose.msra.mxu0 0
  %113 = vmatprep.subr.bf16.mxu0 0
  %114 = vmatpush1.bf16.xpose.msra.mxu0 0
  %115 = vmatprep.subr.bf16.mxu0 0
  %116 = vmatpush1.bf16.xpose.msra.mxu0 0
  %117 = vmatprep.subr.bf16.mxu0 0
  %118 = vmatpush1.bf16.xpose.msra.mxu0 0
  %119 = vmatprep.subr.bf16.mxu0 0
  %120 = vmatpush1.bf16.xpose.msra.mxu0 0
  %121 = vmatprep.subr.bf16.mxu0 0
  %122 = vmatpush1.bf16.xpose.msra.mxu0 0
  %123 = vmatprep.subr.bf16.mxu0 0
  %124 = vmatpush1.bf16.xpose.msra.mxu0 0
  %125 = vmatprep.subr.bf16.mxu0 0
  %126 = vmatpush1.bf16.xpose.msra.mxu0 0
  %127 = vmatprep.subr.bf16.mxu0 0
  %128 = vmatpush1.bf16.xpose.msra.mxu0 0
  %129 = vmatprep.subr.bf16.mxu0 0
  %130 = vmatpush1.bf16.xpose.msra.mxu0 0
  %131 = vmatprep.subr.bf16.mxu0 0
  %132 = vmatpush1.bf16.xpose.msra.mxu0 0
  %133 = vmatprep.subr.bf16.mxu0 0
  %134 = vmatpush1.bf16.xpose.msra.mxu0 0
  %135 = vmatprep.subr.bf16.mxu0 0
  %136 = vmatpush1.bf16.xpose.msra.mxu0 0
  %137 = vmatprep.mubr.bf16.mxu0 0
  %138 = vmatmul.mubr.bf16.gmra.mrb[0].mxu0 %v100
  %v139 = vpop.f32.mrb[0].mxu0
  %v140 = vadd.f32 %v39, %v139
  %v141 = vpop.f32.mrb[0].mxu0
  %v142 = vpop.f32.mrb[0].mxu0
  %v143 = vpop.f32.mrb[0].mxu0
  %144 = vdwg.mxu0
  %vm145 = vcmask 72704
  %v146 = vsel %vm145, %v89, -inf
  %147 = vmax.xlane.f32.xlu0 %v146
  %v148 = vpop.xlane.xlu0 %147
  %v149 = vsel %vm145, %v140, -inf
  %150 = vmax.xlane.f32.xlu0 %v149
  %v151 = vpop.xlane.xlu0 %150
  %v152 = vsub.f32 %v89, %v148
  %v153 = vsub.f32 %v140, %v151
  %v154 = vmul.f32 %v152, 1.442695
  %v155 = vpow.pop %v154
  %v156 = vmul.f32 %v153, 1.442695
  %v157 = vpow.pop %v156
  %v158 = vsel %vm145, %v155, 0.0
  %159 = vadd.xlane.f32.xlu0 %v158
  %v160 = vpop.xlane.xlu0 %159
  %v161 = vsel %vm145, %v157, 0.0
  %162 = vadd.xlane.f32.xlu0 %v161
  %v163 = vpop.xlane.xlu0 %162
  %v164 = vmul.f32 %v160, 4.0
  %v165 = vmul.f32 %v163, 4.0
  %v166 = vrcp.pop %v164
  %v167 = vrcp.pop %v165
  %v168 = vmul.f32 %v155, %v166
  %v169 = vmul.f32 %v157, %v167
  %v170 = vadd.f32 %v168, 0.0
  %v171 = vadd.f32 %v169, 0.0
  %v173 = vunpack.c.l.b16 %v18
  %v174 = vpack.c.b16 %v173, %v173
  %175 = vrot.lane.b32.xlu0 %v174, 120
  %v176 = vpop.permute.xlu0 %175
  %177 = vrot.lane.b32.xlu0 %v46, 120
  %v178 = vpop.permute.xlu0 %177
  %v180 = vsel %vm47, %v176, 0
  %v183 = vsel %vm47, %v178, 0
  %185 = vmatprep.subr.bf16.mxu0 0
  %186 = vmatpush1.bf16.xpose.msra.mxu0 %v183
  %187 = vmatprep.subr.bf16.mxu0 0
  %188 = vmatpush1.bf16.xpose.msra.mxu0 0
  %189 = vmatprep.subr.bf16.mxu0 0
  %190 = vmatpush1.bf16.xpose.msra.mxu0 0
  %191 = vmatprep.subr.bf16.mxu0 0
  %192 = vmatpush1.bf16.xpose.msra.mxu0 0
  %193 = vmatprep.subr.bf16.mxu0 0
  %194 = vmatpush1.bf16.xpose.msra.mxu0 0
  %195 = vmatprep.subr.bf16.mxu0 0
  %196 = vmatpush1.bf16.xpose.msra.mxu0 0
  %197 = vmatprep.subr.bf16.mxu0 0
  %198 = vmatpush1.bf16.xpose.msra.mxu0 0
  %199 = vmatprep.subr.bf16.mxu0 0
  %200 = vmatpush1.bf16.xpose.msra.mxu0 0
  %201 = vmatprep.subr.bf16.mxu0 0
  %202 = vmatpush1.bf16.xpose.msra.mxu0 0
  %203 = vmatprep.subr.bf16.mxu0 0
  %204 = vmatpush1.bf16.xpose.msra.mxu0 0
  %205 = vmatprep.subr.bf16.mxu0 0
  %206 = vmatpush1.bf16.xpose.msra.mxu0 0
  %207 = vmatprep.subr.bf16.mxu0 0
  %208 = vmatpush1.bf16.xpose.msra.mxu0 0
  %209 = vmatprep.subr.bf16.mxu0 0
  %210 = vmatpush1.bf16.xpose.msra.mxu0 0
  %211 = vmatprep.subr.bf16.mxu0 0
  %212 = vmatpush1.bf16.xpose.msra.mxu0 0
  %213 = vmatprep.subr.bf16.mxu0 0
  %214 = vmatpush1.bf16.xpose.msra.mxu0 0
  %215 = vmatprep.subr.bf16.mxu0 0
  %216 = vmatpush1.bf16.xpose.msra.mxu0 0
  %217 = vmatprep.mubr.bf16.mxu0 0
  %218 = vmatmul.mubr.bf16.gmra.mrb[0].mxu0 %v180
  %v219 = vpop.f32.mrb[0].mxu0
  %v220 = vadd.f32 %v35, %v219
  %v221 = vpop.f32.mrb[0].mxu0
  %v222 = vpop.f32.mrb[0].mxu0
  %v223 = vpop.f32.mrb[0].mxu0
  %224 = vdwg.mxu0
  %v226 = vunpack.c.l.b16 %v19
  %v227 = vpack.c.b16 %v226, %v226
  %228 = vrot.lane.b32.xlu0 %v227, 120
  %v229 = vpop.permute.xlu0 %228
  %230 = vrot.lane.b32.xlu0 %v98, 120
  %v231 = vpop.permute.xlu0 %230
  %v233 = vsel %vm47, %v229, 0
  %v236 = vsel %vm47, %v231, 0
  %238 = vmatprep.subr.bf16.mxu0 0
  %239 = vmatpush1.bf16.xpose.msra.mxu0 %v236
  %240 = vmatprep.subr.bf16.mxu0 0
  %241 = vmatpush1.bf16.xpose.msra.mxu0 0
  %242 = vmatprep.subr.bf16.mxu0 0
  %243 = vmatpush1.bf16.xpose.msra.mxu0 0
  %244 = vmatprep.subr.bf16.mxu0 0
  %245 = vmatpush1.bf16.xpose.msra.mxu0 0
  %246 = vmatprep.subr.bf16.mxu0 0
  %247 = vmatpush1.bf16.xpose.msra.mxu0 0
  %248 = vmatprep.subr.bf16.mxu0 0
  %249 = vmatpush1.bf16.xpose.msra.mxu0 0
  %250 = vmatprep.subr.bf16.mxu0 0
  %251 = vmatpush1.bf16.xpose.msra.mxu0 0
  %252 = vmatprep.subr.bf16.mxu0 0
  %253 = vmatpush1.bf16.xpose.msra.mxu0 0
  %254 = vmatprep.subr.bf16.mxu0 0
  %255 = vmatpush1.bf16.xpose.msra.mxu0 0
  %256 = vmatprep.subr.bf16.mxu0 0
  %257 = vmatpush1.bf16.xpose.msra.mxu0 0
  %258 = vmatprep.subr.bf16.mxu0 0
  %259 = vmatpush1.bf16.xpose.msra.mxu0 0
  %260 = vmatprep.subr.bf16.mxu0 0
  %261 = vmatpush1.bf16.xpose.msra.mxu0 0
  %262 = vmatprep.subr.bf16.mxu0 0
  %263 = vmatpush1.bf16.xpose.msra.mxu0 0
  %264 = vmatprep.subr.bf16.mxu0 0
  %265 = vmatpush1.bf16.xpose.msra.mxu0 0
  %266 = vmatprep.subr.bf16.mxu0 0
  %267 = vmatpush1.bf16.xpose.msra.mxu0 0
  %268 = vmatprep.subr.bf16.mxu0 0
  %269 = vmatpush1.bf16.xpose.msra.mxu0 0
  %270 = vmatprep.mubr.bf16.mxu0 0
  %271 = vmatmul.mubr.bf16.gmra.mrb[0].mxu0 %v233
  %v272 = vpop.f32.mrb[0].mxu0
  %v273 = vadd.f32 %v39, %v272
  %v274 = vpop.f32.mrb[0].mxu0
  %v275 = vpop.f32.mrb[0].mxu0
  %v276 = vpop.f32.mrb[0].mxu0
  %277 = vdwg.mxu0
  %v278 = vsel %vm145, %v220, -inf
  %279 = vmax.xlane.f32.xlu0 %v278
  %v280 = vpop.xlane.xlu0 %279
  %v281 = vsel %vm145, %v273, -inf
  %282 = vmax.xlane.f32.xlu0 %v281
  %v283 = vpop.xlane.xlu0 %282
  %v284 = vsub.f32 %v220, %v280
  %v285 = vsub.f32 %v273, %v283
  %v286 = vmul.f32 %v284, 1.442695
  %v287 = vpow.pop %v286
  %v288 = vmul.f32 %v285, 1.442695
  %v289 = vpow.pop %v288
  %v290 = vsel %vm145, %v287, 0.0
  %291 = vadd.xlane.f32.xlu0 %v290
  %v292 = vpop.xlane.xlu0 %291
  %v293 = vsel %vm145, %v289, 0.0
  %294 = vadd.xlane.f32.xlu0 %v293
  %v295 = vpop.xlane.xlu0 %294
  %v296 = vmul.f32 %v292, 4.0
  %v297 = vmul.f32 %v295, 4.0
  %v298 = vrcp.pop %v296
  %v299 = vrcp.pop %v297
  %v300 = vmul.f32 %v287, %v298
  %v301 = vmul.f32 %v289, %v299
  %v302 = vadd.f32 %v170, %v300
  %v303 = vadd.f32 %v171, %v301
  %304 = vrot.lane.b32.xlu0 %v174, 112
  %v305 = vpop.permute.xlu0 %304
  %306 = vrot.lane.b32.xlu0 %v46, 112
  %v307 = vpop.permute.xlu0 %306
  %v309 = vsel %vm47, %v305, 0
  %v312 = vsel %vm47, %v307, 0
  %314 = vmatprep.subr.bf16.mxu0 0
  %315 = vmatpush1.bf16.xpose.msra.mxu0 %v312
  %316 = vmatprep.subr.bf16.mxu0 0
  %317 = vmatpush1.bf16.xpose.msra.mxu0 0
  %318 = vmatprep.subr.bf16.mxu0 0
  %319 = vmatpush1.bf16.xpose.msra.mxu0 0
  %320 = vmatprep.subr.bf16.mxu0 0
  %321 = vmatpush1.bf16.xpose.msra.mxu0 0
  %322 = vmatprep.subr.bf16.mxu0 0
  %323 = vmatpush1.bf16.xpose.msra.mxu0 0
  %324 = vmatprep.subr.bf16.mxu0 0
  %325 = vmatpush1.bf16.xpose.msra.mxu0 0
  %326 = vmatprep.subr.bf16.mxu0 0
  %327 = vmatpush1.bf16.xpose.msra.mxu0 0
  %328 = vmatprep.subr.bf16.mxu0 0
  %329 = vmatpush1.bf16.xpose.msra.mxu0 0
  %330 = vmatprep.subr.bf16.mxu0 0
  %331 = vmatpush1.bf16.xpose.msra.mxu0 0
  %332 = vmatprep.subr.bf16.mxu0 0
  %333 = vmatpush1.bf16.xpose.msra.mxu0 0
  %334 = vmatprep.subr.bf16.mxu0 0
  %335 = vmatpush1.bf16.xpose.msra.mxu0 0
  %336 = vmatprep.subr.bf16.mxu0 0
  %337 = vmatpush1.bf16.xpose.msra.mxu0 0
  %338 = vmatprep.subr.bf16.mxu0 0
  %339 = vmatpush1.bf16.xpose.msra.mxu0 0
  %340 = vmatprep.subr.bf16.mxu0 0
  %341 = vmatpush1.bf16.xpose.msra.mxu0 0
  %342 = vmatprep.subr.bf16.mxu0 0
  %343 = vmatpush1.bf16.xpose.msra.mxu0 0
  %344 = vmatprep.subr.bf16.mxu0 0
  %345 = vmatpush1.bf16.xpose.msra.mxu0 0
  %346 = vmatprep.mubr.bf16.mxu0 0
  %347 = vmatmul.mubr.bf16.gmra.mrb[0].mxu0 %v309
  %v348 = vpop.f32.mrb[0].mxu0
  %v349 = vadd.f32 %v35, %v348
  %v350 = vpop.f32.mrb[0].mxu0
  %v351 = vpop.f32.mrb[0].mxu0
  %v352 = vpop.f32.mrb[0].mxu0
  %353 = vdwg.mxu0
  %354 = vrot.lane.b32.xlu0 %v227, 112
  %v355 = vpop.permute.xlu0 %354
  %356 = vrot.lane.b32.xlu0 %v98, 112
  %v357 = vpop.permute.xlu0 %356
  %v359 = vsel %vm47, %v355, 0
  %v362 = vsel %vm47, %v357, 0
  %364 = vmatprep.subr.bf16.mxu0 0
  %365 = vmatpush1.bf16.xpose.msra.mxu0 %v362
  %366 = vmatprep.subr.bf16.mxu0 0
  %367 = vmatpush1.bf16.xpose.msra.mxu0 0
  %368 = vmatprep.subr.bf16.mxu0 0
  %369 = vmatpush1.bf16.xpose.msra.mxu0 0
  %370 = vmatprep.subr.bf16.mxu0 0
  %371 = vmatpush1.bf16.xpose.msra.mxu0 0
  %372 = vmatprep.subr.bf16.mxu0 0
  %373 = vmatpush1.bf16.xpose.msra.mxu0 0
  %374 = vmatprep.subr.bf16.mxu0 0
  %375 = vmatpush1.bf16.xpose.msra.mxu0 0
  %376 = vmatprep.subr.bf16.mxu0 0
  %377 = vmatpush1.bf16.xpose.msra.mxu0 0
  %378 = vmatprep.subr.bf16.mxu0 0
  %379 = vmatpush1.bf16.xpose.msra.mxu0 0
  %380 = vmatprep.subr.bf16.mxu0 0
  %381 = vmatpush1.bf16.xpose.msra.mxu0 0
  %382 = vmatprep.subr.bf16.mxu0 0
  %383 = vmatpush1.bf16.xpose.msra.mxu0 0
  %384 = vmatprep.subr.bf16.mxu0 0
  %385 = vmatpush1.bf16.xpose.msra.mxu0 0
  %386 = vmatprep.subr.bf16.mxu0 0
  %387 = vmatpush1.bf16.xpose.msra.mxu0 0
  %388 = vmatprep.subr.bf16.mxu0 0
  %389 = vmatpush1.bf16.xpose.msra.mxu0 0
  %390 = vmatprep.subr.bf16.mxu0 0
  %391 = vmatpush1.bf16.xpose.msra.mxu0 0
  %392 = vmatprep.subr.bf16.mxu0 0
  %393 = vmatpush1.bf16.xpose.msra.mxu0 0
  %394 = vmatprep.subr.bf16.mxu0 0
  %395 = vmatpush1.bf16.xpose.msra.mxu0 0
  %396 = vmatprep.mubr.bf16.mxu0 0
  %397 = vmatmul.mubr.bf16.gmra.mrb[0].mxu0 %v359
  %v398 = vpop.f32.mrb[0].mxu0
  %v399 = vadd.f32 %v39, %v398
  %v400 = vpop.f32.mrb[0].mxu0
  %v401 = vpop.f32.mrb[0].mxu0
  %v402 = vpop.f32.mrb[0].mxu0
  %403 = vdwg.mxu0
  %v404 = vsel %vm145, %v349, -inf
  %405 = vmax.xlane.f32.xlu0 %v404
  %v406 = vpop.xlane.xlu0 %405
  %v407 = vsel %vm145, %v399, -inf
  %408 = vmax.xlane.f32.xlu0 %v407
  %v409 = vpop.xlane.xlu0 %408
  %v410 = vsub.f32 %v349, %v406
  %v411 = vsub.f32 %v399, %v409
  %v412 = vmul.f32 %v410, 1.442695
  %v413 = vpow.pop %v412
  %v414 = vmul.f32 %v411, 1.442695
  %v415 = vpow.pop %v414
  %v416 = vsel %vm145, %v413, 0.0
  %417 = vadd.xlane.f32.xlu0 %v416
  %v418 = vpop.xlane.xlu0 %417
  %v419 = vsel %vm145, %v415, 0.0
  %420 = vadd.xlane.f32.xlu0 %v419
  %v421 = vpop.xlane.xlu0 %420
  %v422 = vmul.f32 %v418, 4.0
  %v423 = vmul.f32 %v421, 4.0
  %v424 = vrcp.pop %v422
  %v425 = vrcp.pop %v423
  %v426 = vmul.f32 %v413, %v424
  %v427 = vmul.f32 %v415, %v425
  %v428 = vadd.f32 %v302, %v426
  %v429 = vadd.f32 %v303, %v427
  %430 = vrot.lane.b32.xlu0 %v174, 104
  %v431 = vpop.permute.xlu0 %430
  %432 = vrot.lane.b32.xlu0 %v46, 104
  %v433 = vpop.permute.xlu0 %432
  %v435 = vsel %vm47, %v431, 0
  %v438 = vsel %vm47, %v433, 0
  %440 = vmatprep.subr.bf16.mxu0 0
  %441 = vmatpush1.bf16.xpose.msra.mxu0 %v438
  %442 = vmatprep.subr.bf16.mxu0 0
  %443 = vmatpush1.bf16.xpose.msra.mxu0 0
  %444 = vmatprep.subr.bf16.mxu0 0
  %445 = vmatpush1.bf16.xpose.msra.mxu0 0
  %446 = vmatprep.subr.bf16.mxu0 0
  %447 = vmatpush1.bf16.xpose.msra.mxu0 0
  %448 = vmatprep.subr.bf16.mxu0 0
  %449 = vmatpush1.bf16.xpose.msra.mxu0 0
  %450 = vmatprep.subr.bf16.mxu0 0
  %451 = vmatpush1.bf16.xpose.msra.mxu0 0
  %452 = vmatprep.subr.bf16.mxu0 0
  %453 = vmatpush1.bf16.xpose.msra.mxu0 0
  %454 = vmatprep.subr.bf16.mxu0 0
  %455 = vmatpush1.bf16.xpose.msra.mxu0 0
  %456 = vmatprep.subr.bf16.mxu0 0
  %457 = vmatpush1.bf16.xpose.msra.mxu0 0
  %458 = vmatprep.subr.bf16.mxu0 0
  %459 = vmatpush1.bf16.xpose.msra.mxu0 0
  %460 = vmatprep.subr.bf16.mxu0 0
  %461 = vmatpush1.bf16.xpose.msra.mxu0 0
  %462 = vmatprep.subr.bf16.mxu0 0
  %463 = vmatpush1.bf16.xpose.msra.mxu0 0
  %464 = vmatprep.subr.bf16.mxu0 0
  %465 = vmatpush1.bf16.xpose.msra.mxu0 0
  %466 = vmatprep.subr.bf16.mxu0 0
  %467 = vmatpush1.bf16.xpose.msra.mxu0 0
  %468 = vmatprep.subr.bf16.mxu0 0
  %469 = vmatpush1.bf16.xpose.msra.mxu0 0
  %470 = vmatprep.subr.bf16.mxu0 0
  %471 = vmatpush1.bf16.xpose.msra.mxu0 0
  %472 = vmatprep.mubr.bf16.mxu0 0
  %473 = vmatmul.mubr.bf16.gmra.mrb[0].mxu0 %v435
  %v474 = vpop.f32.mrb[0].mxu0
  %v475 = vadd.f32 %v35, %v474
  %v476 = vpop.f32.mrb[0].mxu0
  %v477 = vpop.f32.mrb[0].mxu0
  %v478 = vpop.f32.mrb[0].mxu0
  %479 = vdwg.mxu0
  %480 = vrot.lane.b32.xlu0 %v227, 104
  %v481 = vpop.permute.xlu0 %480
  %482 = vrot.lane.b32.xlu0 %v98, 104
  %v483 = vpop.permute.xlu0 %482
  %v485 = vsel %vm47, %v481, 0
  %v488 = vsel %vm47, %v483, 0
  %490 = vmatprep.subr.bf16.mxu0 0
  %491 = vmatpush1.bf16.xpose.msra.mxu0 %v488
  %492 = vmatprep.subr.bf16.mxu0 0
  %493 = vmatpush1.bf16.xpose.msra.mxu0 0
  %494 = vmatprep.subr.bf16.mxu0 0
  %495 = vmatpush1.bf16.xpose.msra.mxu0 0
  %496 = vmatprep.subr.bf16.mxu0 0
  %497 = vmatpush1.bf16.xpose.msra.mxu0 0
  %498 = vmatprep.subr.bf16.mxu0 0
  %499 = vmatpush1.bf16.xpose.msra.mxu0 0
  %500 = vmatprep.subr.bf16.mxu0 0
  %501 = vmatpush1.bf16.xpose.msra.mxu0 0
  %502 = vmatprep.subr.bf16.mxu0 0
  %503 = vmatpush1.bf16.xpose.msra.mxu0 0
  %504 = vmatprep.subr.bf16.mxu0 0
  %505 = vmatpush1.bf16.xpose.msra.mxu0 0
  %506 = vmatprep.subr.bf16.mxu0 0
  %507 = vmatpush1.bf16.xpose.msra.mxu0 0
  %508 = vmatprep.subr.bf16.mxu0 0
  %509 = vmatpush1.bf16.xpose.msra.mxu0 0
  %510 = vmatprep.subr.bf16.mxu0 0
  %511 = vmatpush1.bf16.xpose.msra.mxu0 0
  %512 = vmatprep.subr.bf16.mxu0 0
  %513 = vmatpush1.bf16.xpose.msra.mxu0 0
  %514 = vmatprep.subr.bf16.mxu0 0
  %515 = vmatpush1.bf16.xpose.msra.mxu0 0
  %516 = vmatprep.subr.bf16.mxu0 0
  %517 = vmatpush1.bf16.xpose.msra.mxu0 0
  %518 = vmatprep.subr.bf16.mxu0 0
  %519 = vmatpush1.bf16.xpose.msra.mxu0 0
  %520 = vmatprep.subr.bf16.mxu0 0
  %521 = vmatpush1.bf16.xpose.msra.mxu0 0
  %522 = vmatprep.mubr.bf16.mxu0 0
  %523 = vmatmul.mubr.bf16.gmra.mrb[0].mxu0 %v485
  %v524 = vpop.f32.mrb[0].mxu0
  %v525 = vadd.f32 %v39, %v524
  %v526 = vpop.f32.mrb[0].mxu0
  %v527 = vpop.f32.mrb[0].mxu0
  %v528 = vpop.f32.mrb[0].mxu0
  %529 = vdwg.mxu0
  %v530 = vsel %vm145, %v475, -inf
  %531 = vmax.xlane.f32.xlu0 %v530
  %v532 = vpop.xlane.xlu0 %531
  %v533 = vsel %vm145, %v525, -inf
  %534 = vmax.xlane.f32.xlu0 %v533
  %v535 = vpop.xlane.xlu0 %534
  %v536 = vsub.f32 %v475, %v532
  %v537 = vsub.f32 %v525, %v535
  %v538 = vmul.f32 %v536, 1.442695
  %v539 = vpow.pop %v538
  %v540 = vmul.f32 %v537, 1.442695
  %v541 = vpow.pop %v540
  %v542 = vsel %vm145, %v539, 0.0
  %543 = vadd.xlane.f32.xlu0 %v542
  %v544 = vpop.xlane.xlu0 %543
  %v545 = vsel %vm145, %v541, 0.0
  %546 = vadd.xlane.f32.xlu0 %v545
  %v547 = vpop.xlane.xlu0 %546
  %v548 = vmul.f32 %v544, 4.0
  %v549 = vmul.f32 %v547, 4.0
  %v550 = vrcp.pop %v548
  %v551 = vrcp.pop %v549
  %v552 = vmul.f32 %v539, %v550
  %v553 = vmul.f32 %v541, %v551
  %v554 = vadd.f32 %v428, %v552
  %v555 = vadd.f32 %v429, %v553
  %v556 = vpack.c.bf16 %v554, %v554
  %v557 = vpack.c.bf16 %v555, %v555
  %v560 = vunpack.c.l.b16 %v24
  %v561 = vunpack.c.l.b16 %v25
  %v562 = vpack.c.b16 %v561, %v560
  %v564 = vsel %vm145, %v556, 0
  %vm566 = vcmask 1043456
  %vm567 = vcmask 1044480
  %v568 = vsel %vm566, 4294967295, 65535
  %v569 = vsel %vm567, %v568, 0
  %v571 = vand.u32 %v562, %v569
  %573 = vmatprep.subr.bf16.mxu0 0
  %574 = vmatpush1.bf16.msra.mxu0 %v571
  %575 = vmatprep.subr.bf16.mxu0 0
  %576 = vmatpush1.bf16.msra.mxu0 0
  %577 = vmatprep.subr.bf16.mxu0 0
  %578 = vmatpush1.bf16.msra.mxu0 0
  %579 = vmatprep.subr.bf16.mxu0 0
  %580 = vmatpush1.bf16.msra.mxu0 0
  %581 = vmatprep.subr.bf16.mxu0 0
  %582 = vmatpush1.bf16.msra.mxu0 0
  %583 = vmatprep.subr.bf16.mxu0 0
  %584 = vmatpush1.bf16.msra.mxu0 0
  %585 = vmatprep.subr.bf16.mxu0 0
  %586 = vmatpush1.bf16.msra.mxu0 0
  %587 = vmatprep.subr.bf16.mxu0 0
  %588 = vmatpush1.bf16.msra.mxu0 0
  %589 = vmatprep.subr.bf16.mxu0 0
  %590 = vmatpush1.bf16.msra.mxu0 0
  %591 = vmatprep.subr.bf16.mxu0 0
  %592 = vmatpush1.bf16.msra.mxu0 0
  %593 = vmatprep.subr.bf16.mxu0 0
  %594 = vmatpush1.bf16.msra.mxu0 0
  %595 = vmatprep.subr.bf16.mxu0 0
  %596 = vmatpush1.bf16.msra.mxu0 0
  %597 = vmatprep.subr.bf16.mxu0 0
  %598 = vmatpush1.bf16.msra.mxu0 0
  %599 = vmatprep.subr.bf16.mxu0 0
  %600 = vmatpush1.bf16.msra.mxu0 0
  %601 = vmatprep.subr.bf16.mxu0 0
  %602 = vmatpush1.bf16.msra.mxu0 0
  %603 = vmatprep.subr.bf16.mxu0 0
  %604 = vmatpush1.bf16.msra.mxu0 0
  %605 = vmatprep.mubr.bf16.mxu0 0
  %606 = vmatmul.mubr.bf16.gmra.mrb[0].mxu0 %v564
  %v607 = vpop.f32.mrb[0].mxu0
  %v608 = vadd.f32 0.0, %v607
  %v609 = vpop.f32.mrb[0].mxu0
  %v610 = vpop.f32.mrb[0].mxu0
  %v611 = vpop.f32.mrb[0].mxu0
  %612 = vdwg.mxu0
  %v615 = vunpack.c.l.b16 %v26
  %v616 = vunpack.c.l.b16 %v27
  %v617 = vpack.c.b16 %v616, %v615
  %v619 = vsel %vm145, %v557, 0
  %v622 = vand.u32 %v617, %v569
  %624 = vmatprep.subr.bf16.mxu0 0
  %625 = vmatpush1.bf16.msra.mxu0 %v622
  %626 = vmatprep.subr.bf16.mxu0 0
  %627 = vmatpush1.bf16.msra.mxu0 0
  %628 = vmatprep.subr.bf16.mxu0 0
  %629 = vmatpush1.bf16.msra.mxu0 0
  %630 = vmatprep.subr.bf16.mxu0 0
  %631 = vmatpush1.bf16.msra.mxu0 0
  %632 = vmatprep.subr.bf16.mxu0 0
  %633 = vmatpush1.bf16.msra.mxu0 0
  %634 = vmatprep.subr.bf16.mxu0 0
  %635 = vmatpush1.bf16.msra.mxu0 0
  %636 = vmatprep.subr.bf16.mxu0 0
  %637 = vmatpush1.bf16.msra.mxu0 0
  %638 = vmatprep.subr.bf16.mxu0 0
  %639 = vmatpush1.bf16.msra.mxu0 0
  %640 = vmatprep.subr.bf16.mxu0 0
  %641 = vmatpush1.bf16.msra.mxu0 0
  %642 = vmatprep.subr.bf16.mxu0 0
  %643 = vmatpush1.bf16.msra.mxu0 0
  %644 = vmatprep.subr.bf16.mxu0 0
  %645 = vmatpush1.bf16.msra.mxu0 0
  %646 = vmatprep.subr.bf16.mxu0 0
  %647 = vmatpush1.bf16.msra.mxu0 0
  %648 = vmatprep.subr.bf16.mxu0 0
  %649 = vmatpush1.bf16.msra.mxu0 0
  %650 = vmatprep.subr.bf16.mxu0 0
  %651 = vmatpush1.bf16.msra.mxu0 0
  %652 = vmatprep.subr.bf16.mxu0 0
  %653 = vmatpush1.bf16.msra.mxu0 0
  %654 = vmatprep.subr.bf16.mxu0 0
  %655 = vmatpush1.bf16.msra.mxu0 0
  %656 = vmatprep.mubr.bf16.mxu0 0
  %657 = vmatmul.mubr.bf16.gmra.mrb[0].mxu0 %v619
  %v658 = vpop.f32.mrb[0].mxu0
  %v659 = vadd.f32 0.0, %v658
  %v660 = vpop.f32.mrb[0].mxu0
  %v661 = vpop.f32.mrb[0].mxu0
  %v662 = vpop.f32.mrb[0].mxu0
  %663 = vdwg.mxu0
  %v664 = vpack.c.bf16 %v608, %v608
  %v665 = vpack.c.bf16 %v659, %v659
  %vm666 = vcmask 388096
  %667 = vst.msk [vmem:[%s4] sm:$0xf] %vm666, %v664
  %668 = vst.msk [vmem:[%s4 + $0x4] sm:$0xf] %vm666, %v665
  // Predicated region
  $region18: #{normal_sublayer_forward.9} parent=0 // pred_check
    _
  $region19: #{normal_sublayer_forward.9} parent=0 // pred_check_branch
    %670 = sbr.rel (0) target = $region21
  $region20: #{normal_sublayer_forward.9} parent=0 // pred_region
    _
  $region21: #{normal_sublayer_forward.9} parent=0 // pred_fallthru
    _
  // Predicated region
  $region22: #{normal_sublayer_forward.9} parent=0 // pred_check
    _
  $region23: #{normal_sublayer_forward.9} parent=0 // pred_check_branch
    %672 = sbr.rel (0) target = $region25
  $region24: #{normal_sublayer_forward.9} parent=0 // pred_region
    _
  $region25: #{normal_sublayer_forward.9} parent=0 // pred_fallthru
    _

</llo_original>
